<compile_context>
chip_gen: v5e
topology: v5e:2x2
jax: 0.10.0
libtpu: 0.0.40
codegen_flags: <defaults>
</compile_context>

<pallas_src>
import functools
from typing import NamedTuple

import jax
import jax.numpy as jnp
from jax.experimental import pallas as pl
from jax.experimental.pallas import tpu as pltpu


def _round_up(x, m):
    return (x + m - 1) // m * m


class StateMLPConfig(NamedTuple):
    action_dim: int
    obs_dim: int
    horizon_size: int
    num_layers: int
    d_in: int
    d_in_pad: int
    d_model: int
    d_out: int
    d_out_pad: int
    h_beta: int
    z_pad: int
    num_tds: int
    num_mid: int
    num_pairs: int
    n_rows_pad: int


# ----------------------------- Pallas kernel ------------------------------ #

def _build_mlp_kernel(cfg: StateMLPConfig):
    """Whole tMLP forward for one (TILE_B, ·) batch tile; weights stay VMEM-resident."""
    num_tds, num_pairs = cfg.num_tds, cfg.num_pairs
    h_beta, d_model = cfg.h_beta, cfg.d_model
    d_out_pad, z_pad = cfg.d_out_pad, cfg.z_pad

    def softplus(v):
        # numerically stable softplus, f32 only (v5e VPU/EUP have no bf16)
        return jnp.maximum(v, 0.0) + jnp.log(1.0 + jnp.exp(-jnp.abs(v)))

    def sigmoid(v):
        # tanh form: one EUP push (tanh) instead of exp + reciprocal
        return 0.5 * (jnp.tanh(0.5 * v) + 1.0)

    def kernel(h_ref, t_ref, w_first_ref, w_mid_ref, w_last_ref,
               bw2_ref, rows_ref, beta_rows_ref, out_ref):
        t = t_ref[...]                                     # (TB, 1) f32

        # ---- hoisted TimeDependentSwish beta computation (depends only on t) ----
        # z for all swishes packed 64 lanes each (no softplus over padding lanes).
        bw1 = beta_rows_ref[0:1, :z_pad]                   # (1, z_pad) f32
        bb1 = beta_rows_ref[1:2, :z_pad]
        z = softplus(t * bw1 + bb1).astype(jnp.bfloat16)   # (TB, z_pad)

        betas = []
        for p in range(num_pairs):                         # two swishes per 128-lane group
            n_td = min(2, num_tds - 2 * p)
            zp = z[:, p * 2 * h_beta:(p + 1) * 2 * h_beta]            # aligned 128-lane slice
            pre = jnp.dot(zp, bw2_ref[p], preferred_element_type=jnp.float32)
            pre = pre[:, :n_td * d_model]                              # drop unused cols (odd tail)
            bb2 = beta_rows_ref[2:3, 2 * p * d_model:(2 * p + n_td) * d_model]
            bp = softplus(pre + bb2)                                   # (TB, n_td*128)
            for q in range(n_td):
                betas.append(bp[:, q * d_model:(q + 1) * d_model])     # (TB, 128) each

        # ---- ConcatLinear_v2 chain ----
        def row(k):                                        # static slice of the param slab
            return rows_ref[pl.ds(k, 1), :]                # (1, 128) f32

        def concat_linear(x, w, b, hb):
            # ConcatLinear_v2: Linear(x) + hyper_bias(t)
            y = jnp.dot(x.astype(jnp.bfloat16), w, preferred_element_type=jnp.float32)
            return y + b + t * hb

        x = concat_linear(h_ref[...], w_first_ref[...], row(0), row(1))
        for s in range(num_tds):
            x = x * sigmoid(x * betas[s])                  # TimeDependentSwish
            base = 2 + 2 * s
            if s < num_tds - 1:
                x = concat_linear(x, w_mid_ref[s], row(base), row(base + 1))
            else:
                x = concat_linear(x, w_last_ref[...],
                                  row(base)[:, :d_out_pad],
                                  row(base + 1)[:, :d_out_pad])
        out_ref[...] = x.astype(out_ref.dtype)             # (TB, 16) store

    return kernel


# --------------------------- parameter creation ---------------------------- #

def init_state_mlp_params(key, action_dim=2, hidden_dim=128, horizon_size=5,
                          num_layers=6, num_classes=2, label_embedding_dim=8):
    assert num_layers >= 2
    obs_dim = 2 * action_dim + 1
    d_in = obs_dim + action_dim * horizon_size + label_embedding_dim    # 23
    d_out = horizon_size * action_dim                                   # 10
    d_model = hidden_dim                                                # 128
    h_beta = min(64, d_model * 4)                                       # 64
    # packed-beta layout assumes two 64-wide beta hiddens per 128-lane group
    assert d_model == 128 and 2 * h_beta == d_model

    d_in_pad = _round_up(d_in, 16)          # bf16 sublane tile for w_first rows
    d_out_pad = _round_up(d_out, 16)        # narrow output (full-dim block is exempt)
    num_tds = num_layers - 1
    num_mid = num_tds - 1
    num_pairs = (num_tds + 1) // 2
    z_pad = num_pairs * 2 * h_beta          # packed beta-hidden lane count (384)
    n_rows = 2 + 2 * num_tds
    n_rows_pad = _round_up(n_rows, 8)

    keys = iter(jax.random.split(key, 64))

    def dense(fin, fout):
        s = float(fin) ** -0.5
        return jax.random.uniform(next(keys), (fin, fout), jnp.float32, -s, s)

    def bias(fin, fout):
        s = float(fin) ** -0.5
        return jax.random.uniform(next(keys), (fout,), jnp.float32, -s, s)

    # --- ConcatLinear_v2 weights (bf16, zero-padded) ---
    w_first = jnp.zeros((d_in_pad, d_model), jnp.float32)
    w_first = w_first.at[:d_in, :].set(dense(d_in, d_model)).astype(jnp.bfloat16)

    w_mid_list = [dense(d_model, d_model) for _ in range(num_mid)]
    w_mid = (jnp.stack(w_mid_list, 0) if num_mid > 0
             else jnp.zeros((1, d_model, d_model), jnp.float32)).astype(jnp.bfloat16)

    w_last = jnp.zeros((d_model, d_out_pad), jnp.float32)
    w_last = w_last.at[:, :d_out].set(dense(d_model, d_out)).astype(jnp.bfloat16)

    # --- small (1, fout) params packed into one f32 slab ---
    # rows[0]=bias_first, rows[1]=hyper_bias_first(=0, as in PyTorch);
    # per swish-following linear s: rows[2+2s]=bias_s, rows[3+2s]=hyper_bias_s(=0).
    rows = jnp.zeros((n_rows_pad, d_model), jnp.float32)
    rows = rows.at[0, :].set(bias(d_in, d_model))
    for s in range(num_tds):
        fout = d_model if s < num_tds - 1 else d_out
        rows = rows.at[2 + 2 * s, :fout].set(bias(d_model, fout))

    # --- TimeDependentSwish beta-net params, packed ---
    # beta_rows[0]=bw1_all, [1]=bb1_all (lanes s*64:(s+1)*64), [2]=bb2_all (lanes s*128:(s+1)*128).
    # bw2 stored block-diagonally per pair: rows 0:64 -> cols 0:128, rows 64:128 -> cols 128:256.
    z2 = max(z_pad, num_tds * d_model)
    beta_rows = jnp.zeros((8, z2), jnp.float32)
    bw2 = jnp.zeros((num_pairs, 2 * h_beta, 2 * d_model), jnp.float32)
    for s in range(num_tds):
        beta_rows = beta_rows.at[0, s * h_beta:(s + 1) * h_beta].set(dense(1, h_beta)[0])
        beta_rows = beta_rows.at[1, s * h_beta:(s + 1) * h_beta].set(bias(1, h_beta))
        beta_rows = beta_rows.at[2, s * d_model:(s + 1) * d_model].set(bias(h_beta, d_model))
        p, q = divmod(s, 2)
        bw2 = bw2.at[p, q * h_beta:(q + 1) * h_beta,
                     q * d_model:(q + 1) * d_model].set(dense(h_beta, d_model))
    bw2 = bw2.astype(jnp.bfloat16)

    params = dict(
        w_first=w_first,                    # (d_in_pad, d_model) bf16
        w_mid=w_mid,                        # (num_mid, d_model, d_model) bf16
        w_last=w_last,                      # (d_model, d_out_pad) bf16
        bw2=bw2,                            # (num_pairs, 128, 256) bf16 block-diag pairs
        rows=rows,                          # (n_rows_pad, d_model) f32
        beta_rows=beta_rows,                # (8, max(z_pad, num_tds*128)) f32
        embedding=jax.random.normal(next(keys), (num_classes, label_embedding_dim),
                                    jnp.float32),
    )
    cfg = StateMLPConfig(action_dim=action_dim, obs_dim=obs_dim,
                         horizon_size=horizon_size, num_layers=num_layers,
                         d_in=d_in, d_in_pad=d_in_pad, d_model=d_model,
                         d_out=d_out, d_out_pad=d_out_pad, h_beta=h_beta,
                         z_pad=z_pad, num_tds=num_tds, num_mid=num_mid,
                         num_pairs=num_pairs, n_rows_pad=n_rows_pad)
    return params, cfg


# ------------------------------ forward pass ------------------------------- #

@functools.partial(jax.jit, static_argnames=("cfg", "tile_b"))
def state_mlp_forward(params, obs, x, t, label, *, cfg: StateMLPConfig, tile_b=512):
    B = obs.shape[0]

    # glue (reshape / embedding gather / concat) stays in plain JAX
    obs2 = obs.reshape(B, cfg.obs_dim).astype(jnp.float32)
    xf = x.reshape(B, cfg.action_dim * cfg.horizon_size).astype(jnp.float32)
    tf = t.reshape(B, 1).astype(jnp.float32)
    emb = jnp.take(params["embedding"], label, axis=0).astype(jnp.float32)
    h = jnp.concatenate([obs2, xf, emb], axis=1)                    # (B, d_in) f32

    # ---- batch tiling: big tiles amortize per-step overhead; guarantee >=2 programs
    # (v7x megacore) when the batch allows it; tiny batches only pad to 16 rows. ----
    tile_b = max(16, _round_up(tile_b, 16))
    b_rows = _round_up(B, 16)
    tb = min(tile_b, b_rows)
    if b_rows >= 32:
        tb = min(tb, _round_up(pl.cdiv(b_rows, 2), 16))
    b_pad = _round_up(b_rows, tb)

    # bf16 activations into the kernel (first matmul is bf16 anyway); zero feature pad
    h = jnp.pad(h, ((0, b_pad - B), (0, cfg.d_in_pad - cfg.d_in))).astype(jnp.bfloat16)
    tf = jnp.pad(tf, ((0, b_pad - B), (0, 0)))

    kernel = _build_mlp_kernel(cfg)
    out = pl.pallas_call(
        kernel,
        out_shape=jax.ShapeDtypeStruct((b_pad, cfg.d_out_pad), jnp.float32),
        grid=(b_pad // tb,),
        in_specs=[
            # per-tile activations
            pl.BlockSpec((tb, cfg.d_in_pad), lambda i: (i, 0)),
            pl.BlockSpec((tb, 1), lambda i: (i, 0)),
            # weights: constant index_map -> DMA'd once, VMEM-resident across the grid
            pl.BlockSpec(params["w_first"].shape, lambda i: (0, 0)),
            pl.BlockSpec(params["w_mid"].shape, lambda i: (0, 0, 0)),
            pl.BlockSpec(params["w_last"].shape, lambda i: (0, 0)),
            pl.BlockSpec(params["bw2"].shape, lambda i: (0, 0, 0)),
            pl.BlockSpec(params["rows"].shape, lambda i: (0, 0)),
            pl.BlockSpec(params["beta_rows"].shape, lambda i: (0, 0)),
        ],
        out_specs=pl.BlockSpec((tb, cfg.d_out_pad), lambda i: (i, 0)),
        compiler_params=pltpu.CompilerParams(
            dimension_semantics=("parallel",)),   # megacore split on v7x, no-op on v5e/v6e
    )(h, tf, params["w_first"], params["w_mid"], params["w_last"],
      params["bw2"], params["rows"], params["beta_rows"])

    out = out[:B, :cfg.d_out]                                        # drop batch / lane padding
    return out.reshape(B, cfg.horizon_size, cfg.action_dim)


# ---------------------------------- main ----------------------------------- #

if __name__ == "__main__":
    key = jax.random.PRNGKey(0)
    kp, ko, kx, kt, kl = jax.random.split(key, 5)

    params, cfg = init_state_mlp_params(kp)   # action_dim=2, hidden=128, horizon=5, layers=6

    B = 2
    obs = jax.random.normal(ko, (B, cfg.obs_dim), jnp.float32)       # (B, obs_dim = 2*2+1)
    x = jax.random.normal(kx, (B, cfg.horizon_size, cfg.action_dim), jnp.float32)
    t = jax.random.uniform(kt, (B,), jnp.float32)                    # (B,)
    label = jax.random.randint(kl, (B,), 0, 2)                       # (B,) int class ids

    out = state_mlp_forward(params, obs, x, t, label, cfg=cfg)
    jax.block_until_ready(out)
    assert out.shape == (B, cfg.horizon_size, cfg.action_dim) and out.dtype == jnp.float32
    assert bool(jnp.all(jnp.isfinite(out)))
    print("KERNEL_OK")
</pallas_src>

<mosaic_0001>
module attributes {stable_mosaic.version = 11 : i64} {
  func.func @kernel(%arg0: i32, %arg1: memref<16x32xbf16, #tpu.memory_space<vmem>>, %arg2: memref<16x1xf32, #tpu.memory_space<vmem>>, %arg3: memref<32x128xbf16, #tpu.memory_space<vmem>>, %arg4: memref<4x128x128xbf16, #tpu.memory_space<vmem>>, %arg5: memref<128x16xbf16, #tpu.memory_space<vmem>>, %arg6: memref<3x128x256xbf16, #tpu.memory_space<vmem>>, %arg7: memref<16x128xf32, #tpu.memory_space<vmem>>, %arg8: memref<8x640xf32, #tpu.memory_space<vmem>>, %arg9: memref<16x16xf32, #tpu.memory_space<vmem>>) attributes {dimension_semantics = [#tpu.dimension_semantics<parallel>], iteration_bounds = array<i64: 1>, scalar_prefetch = 0 : i64, scratch_operands = 0 : i64, tpu.core_type = #tpu.core_type<tc>, window_params = [{transform_indices = @transform_0, window_bounds = array<i64: 16, 32>}, {transform_indices = @transform_1, window_bounds = array<i64: 16, 1>}, {pipeline_mode = #tpu.pipeline_mode<synchronous>, transform_indices = @transform_2, window_bounds = array<i64: 32, 128>}, {pipeline_mode = #tpu.pipeline_mode<synchronous>, transform_indices = @transform_3, window_bounds = array<i64: 4, 128, 128>}, {pipeline_mode = #tpu.pipeline_mode<synchronous>, transform_indices = @transform_4, window_bounds = array<i64: 128, 16>}, {pipeline_mode = #tpu.pipeline_mode<synchronous>, transform_indices = @transform_5, window_bounds = array<i64: 3, 128, 256>}, {pipeline_mode = #tpu.pipeline_mode<synchronous>, transform_indices = @transform_6, window_bounds = array<i64: 16, 128>}, {pipeline_mode = #tpu.pipeline_mode<synchronous>, transform_indices = @transform_7, window_bounds = array<i64: 8, 640>}, {transform_indices = @transform_8, window_bounds = array<i64: 16, 16>}]} {
    %c0 = arith.constant 0 : index
    %c0_0 = arith.constant 0 : index
    %0 = vector.load %arg2[%c0, %c0_0] : memref<16x1xf32, #tpu.memory_space<vmem>>, vector<16x1xf32>
    %c0_1 = arith.constant 0 : index
    %c0_2 = arith.constant 0 : index
    %1 = vector.load %arg8[%c0_1, %c0_2] : memref<8x640xf32, #tpu.memory_space<vmem>>, vector<1x384xf32>
    %c1 = arith.constant 1 : index
    %c0_3 = arith.constant 0 : index
    %2 = vector.load %arg8[%c1, %c0_3] : memref<8x640xf32, #tpu.memory_space<vmem>>, vector<1x384xf32>
    %3 = vector.broadcast %0 : vector<16x1xf32> to vector<16x384xf32>
    %4 = vector.broadcast %1 : vector<1x384xf32> to vector<16x384xf32>
    %5 = arith.mulf %3, %4 : vector<16x384xf32>
    %6 = vector.broadcast %2 : vector<1x384xf32> to vector<16x384xf32>
    %7 = arith.addf %5, %6 : vector<16x384xf32>
    %cst = arith.constant 0.000000e+00 : f32
    %8 = vector.broadcast %cst : f32 to vector<16x384xf32>
    %9 = arith.maximumf %7, %8 : vector<16x384xf32>
    %10 = math.absf %7 : vector<16x384xf32>
    %cst_4 = arith.constant 0.000000e+00 : f32
    %11 = vector.broadcast %cst_4 : f32 to vector<16x384xf32>
    %12 = arith.subf %11, %10 : vector<16x384xf32>
    %13 = math.exp %12 : vector<16x384xf32>
    %cst_5 = arith.constant 1.000000e+00 : f32
    %14 = vector.broadcast %cst_5 : f32 to vector<16x384xf32>
    %15 = arith.addf %14, %13 : vector<16x384xf32>
    %16 = math.log %15 : vector<16x384xf32>
    %17 = arith.addf %9, %16 : vector<16x384xf32>
    %18 = arith.truncf %17 : vector<16x384xf32> to vector<16x384xbf16>
    %19 = vector.extract_strided_slice %18 {offsets = [0, 0], sizes = [16, 128], strides = [1, 1]} : vector<16x384xbf16> to vector<16x128xbf16>
    %c0_6 = arith.constant 0 : index
    %c0_7 = arith.constant 0 : index
    %c0_8 = arith.constant 0 : index
    %20 = vector.load %arg6[%c0_6, %c0_7, %c0_8] : memref<3x128x256xbf16, #tpu.memory_space<vmem>>, vector<1x128x256xbf16>
    %21 = vector.shape_cast %20 : vector<1x128x256xbf16> to vector<128x256xbf16>
    %cst_9 = arith.constant dense<0.000000e+00> : vector<16x256xf32>
    %22 = tpu.matmul %19, %21, %cst_9 {dimension_numbers = #tpu.dot_dimension_numbers<[1], [0], [0], [1], [0, 0, 1, 1], [], []>} : vector<16x128xbf16>, vector<128x256xbf16>, vector<16x256xf32> -> vector<16x256xf32>
    %c2 = arith.constant 2 : index
    %c0_10 = arith.constant 0 : index
    %23 = vector.load %arg8[%c2, %c0_10] : memref<8x640xf32, #tpu.memory_space<vmem>>, vector<1x256xf32>
    %24 = vector.broadcast %23 : vector<1x256xf32> to vector<16x256xf32>
    %25 = arith.addf %22, %24 : vector<16x256xf32>
    %cst_11 = arith.constant 0.000000e+00 : f32
    %26 = vector.broadcast %cst_11 : f32 to vector<16x256xf32>
    %27 = arith.maximumf %25, %26 : vector<16x256xf32>
    %28 = math.absf %25 : vector<16x256xf32>
    %cst_12 = arith.constant 0.000000e+00 : f32
    %29 = vector.broadcast %cst_12 : f32 to vector<16x256xf32>
    %30 = arith.subf %29, %28 : vector<16x256xf32>
    %31 = math.exp %30 : vector<16x256xf32>
    %cst_13 = arith.constant 1.000000e+00 : f32
    %32 = vector.broadcast %cst_13 : f32 to vector<16x256xf32>
    %33 = arith.addf %32, %31 : vector<16x256xf32>
    %34 = math.log %33 : vector<16x256xf32>
    %35 = arith.addf %27, %34 : vector<16x256xf32>
    %36 = vector.extract_strided_slice %35 {offsets = [0, 0], sizes = [16, 128], strides = [1, 1]} : vector<16x256xf32> to vector<16x128xf32>
    %37 = vector.extract_strided_slice %35 {offsets = [0, 128], sizes = [16, 128], strides = [1, 1]} : vector<16x256xf32> to vector<16x128xf32>
    %38 = vector.extract_strided_slice %18 {offsets = [0, 128], sizes = [16, 128], strides = [1, 1]} : vector<16x384xbf16> to vector<16x128xbf16>
    %c1_14 = arith.constant 1 : index
    %c0_15 = arith.constant 0 : index
    %c0_16 = arith.constant 0 : index
    %39 = vector.load %arg6[%c1_14, %c0_15, %c0_16] : memref<3x128x256xbf16, #tpu.memory_space<vmem>>, vector<1x128x256xbf16>
    %40 = vector.shape_cast %39 : vector<1x128x256xbf16> to vector<128x256xbf16>
    %cst_17 = arith.constant dense<0.000000e+00> : vector<16x256xf32>
    %41 = tpu.matmul %38, %40, %cst_17 {dimension_numbers = #tpu.dot_dimension_numbers<[1], [0], [0], [1], [0, 0, 1, 1], [], []>} : vector<16x128xbf16>, vector<128x256xbf16>, vector<16x256xf32> -> vector<16x256xf32>
    %c2_18 = arith.constant 2 : index
    %c256 = arith.constant 256 : index
    %42 = vector.load %arg8[%c2_18, %c256] : memref<8x640xf32, #tpu.memory_space<vmem>>, vector<1x256xf32>
    %43 = vector.broadcast %42 : vector<1x256xf32> to vector<16x256xf32>
    %44 = arith.addf %41, %43 : vector<16x256xf32>
    %cst_19 = arith.constant 0.000000e+00 : f32
    %45 = vector.broadcast %cst_19 : f32 to vector<16x256xf32>
    %46 = arith.maximumf %44, %45 : vector<16x256xf32>
    %47 = math.absf %44 : vector<16x256xf32>
    %cst_20 = arith.constant 0.000000e+00 : f32
    %48 = vector.broadcast %cst_20 : f32 to vector<16x256xf32>
    %49 = arith.subf %48, %47 : vector<16x256xf32>
    %50 = math.exp %49 : vector<16x256xf32>
    %cst_21 = arith.constant 1.000000e+00 : f32
    %51 = vector.broadcast %cst_21 : f32 to vector<16x256xf32>
    %52 = arith.addf %51, %50 : vector<16x256xf32>
    %53 = math.log %52 : vector<16x256xf32>
    %54 = arith.addf %46, %53 : vector<16x256xf32>
    %55 = vector.extract_strided_slice %54 {offsets = [0, 0], sizes = [16, 128], strides = [1, 1]} : vector<16x256xf32> to vector<16x128xf32>
    %56 = vector.extract_strided_slice %54 {offsets = [0, 128], sizes = [16, 128], strides = [1, 1]} : vector<16x256xf32> to vector<16x128xf32>
    %57 = vector.extract_strided_slice %18 {offsets = [0, 256], sizes = [16, 128], strides = [1, 1]} : vector<16x384xbf16> to vector<16x128xbf16>
    %c2_22 = arith.constant 2 : index
    %c0_23 = arith.constant 0 : index
    %c0_24 = arith.constant 0 : index
    %58 = vector.load %arg6[%c2_22, %c0_23, %c0_24] : memref<3x128x256xbf16, #tpu.memory_space<vmem>>, vector<1x128x256xbf16>
    %59 = vector.shape_cast %58 : vector<1x128x256xbf16> to vector<128x256xbf16>
    %cst_25 = arith.constant dense<0.000000e+00> : vector<16x256xf32>
    %60 = tpu.matmul %57, %59, %cst_25 {dimension_numbers = #tpu.dot_dimension_numbers<[1], [0], [0], [1], [0, 0, 1, 1], [], []>} : vector<16x128xbf16>, vector<128x256xbf16>, vector<16x256xf32> -> vector<16x256xf32>
    %61 = vector.extract_strided_slice %60 {offsets = [0, 0], sizes = [16, 128], strides = [1, 1]} : vector<16x256xf32> to vector<16x128xf32>
    %c2_26 = arith.constant 2 : index
    %c512 = arith.constant 512 : index
    %62 = vector.load %arg8[%c2_26, %c512] : memref<8x640xf32, #tpu.memory_space<vmem>>, vector<1x128xf32>
    %63 = vector.broadcast %62 : vector<1x128xf32> to vector<16x128xf32>
    %64 = arith.addf %61, %63 : vector<16x128xf32>
    %cst_27 = arith.constant 0.000000e+00 : f32
    %65 = vector.broadcast %cst_27 : f32 to vector<16x128xf32>
    %66 = arith.maximumf %64, %65 : vector<16x128xf32>
    %67 = math.absf %64 : vector<16x128xf32>
    %cst_28 = arith.constant 0.000000e+00 : f32
    %68 = vector.broadcast %cst_28 : f32 to vector<16x128xf32>
    %69 = arith.subf %68, %67 : vector<16x128xf32>
    %70 = math.exp %69 : vector<16x128xf32>
    %cst_29 = arith.constant 1.000000e+00 : f32
    %71 = vector.broadcast %cst_29 : f32 to vector<16x128xf32>
    %72 = arith.addf %71, %70 : vector<16x128xf32>
    %73 = math.log %72 : vector<16x128xf32>
    %74 = arith.addf %66, %73 : vector<16x128xf32>
    %c0_30 = arith.constant 0 : index
    %c0_31 = arith.constant 0 : index
    %75 = vector.load %arg1[%c0_30, %c0_31] : memref<16x32xbf16, #tpu.memory_space<vmem>>, vector<16x32xbf16>
    %c0_32 = arith.constant 0 : index
    %c0_33 = arith.constant 0 : index
    %76 = vector.load %arg3[%c0_32, %c0_33] : memref<32x128xbf16, #tpu.memory_space<vmem>>, vector<32x128xbf16>
    %c0_34 = arith.constant 0 : index
    %c0_35 = arith.constant 0 : index
    %77 = vector.load %arg7[%c0_34, %c0_35] : memref<16x128xf32, #tpu.memory_space<vmem>>, vector<1x128xf32>
    %c1_36 = arith.constant 1 : index
    %c0_37 = arith.constant 0 : index
    %78 = vector.load %arg7[%c1_36, %c0_37] : memref<16x128xf32, #tpu.memory_space<vmem>>, vector<1x128xf32>
    %cst_38 = arith.constant dense<0.000000e+00> : vector<16x128xf32>
    %79 = tpu.matmul %75, %76, %cst_38 {dimension_numbers = #tpu.dot_dimension_numbers<[1], [0], [0], [1], [0, 0, 1, 1], [], []>} : vector<16x32xbf16>, vector<32x128xbf16>, vector<16x128xf32> -> vector<16x128xf32>
    %80 = vector.broadcast %77 : vector<1x128xf32> to vector<16x128xf32>
    %81 = arith.addf %79, %80 : vector<16x128xf32>
    %82 = vector.broadcast %0 : vector<16x1xf32> to vector<16x128xf32>
    %83 = vector.broadcast %78 : vector<1x128xf32> to vector<16x128xf32>
    %84 = arith.mulf %82, %83 : vector<16x128xf32>
    %85 = arith.addf %81, %84 : vector<16x128xf32>
    %86 = arith.mulf %85, %36 : vector<16x128xf32>
    %cst_39 = arith.constant 5.000000e-01 : f32
    %87 = vector.broadcast %cst_39 : f32 to vector<16x128xf32>
    %88 = arith.mulf %87, %86 : vector<16x128xf32>
    %89 = math.tanh %88 : vector<16x128xf32>
    %cst_40 = arith.constant 1.000000e+00 : f32
    %90 = vector.broadcast %cst_40 : f32 to vector<16x128xf32>
    %91 = arith.addf %89, %90 : vector<16x128xf32>
    %cst_41 = arith.constant 5.000000e-01 : f32
    %92 = vector.broadcast %cst_41 : f32 to vector<16x128xf32>
    %93 = arith.mulf %92, %91 : vector<16x128xf32>
    %94 = arith.mulf %85, %93 : vector<16x128xf32>
    %c0_42 = arith.constant 0 : index
    %c0_43 = arith.constant 0 : index
    %c0_44 = arith.constant 0 : index
    %95 = vector.load %arg4[%c0_42, %c0_43, %c0_44] : memref<4x128x128xbf16, #tpu.memory_space<vmem>>, vector<1x128x128xbf16>
    %96 = vector.shape_cast %95 : vector<1x128x128xbf16> to vector<128x128xbf16>
    %c2_45 = arith.constant 2 : index
    %c0_46 = arith.constant 0 : index
    %97 = vector.load %arg7[%c2_45, %c0_46] : memref<16x128xf32, #tpu.memory_space<vmem>>, vector<1x128xf32>
    %c3 = arith.constant 3 : index
    %c0_47 = arith.constant 0 : index
    %98 = vector.load %arg7[%c3, %c0_47] : memref<16x128xf32, #tpu.memory_space<vmem>>, vector<1x128xf32>
    %99 = arith.truncf %94 : vector<16x128xf32> to vector<16x128xbf16>
    %cst_48 = arith.constant dense<0.000000e+00> : vector<16x128xf32>
    %100 = tpu.matmul %99, %96, %cst_48 {dimension_numbers = #tpu.dot_dimension_numbers<[1], [0], [0], [1], [0, 0, 1, 1], [], []>} : vector<16x128xbf16>, vector<128x128xbf16>, vector<16x128xf32> -> vector<16x128xf32>
    %101 = vector.broadcast %97 : vector<1x128xf32> to vector<16x128xf32>
    %102 = arith.addf %100, %101 : vector<16x128xf32>
    %103 = vector.broadcast %0 : vector<16x1xf32> to vector<16x128xf32>
    %104 = vector.broadcast %98 : vector<1x128xf32> to vector<16x128xf32>
    %105 = arith.mulf %103, %104 : vector<16x128xf32>
    %106 = arith.addf %102, %105 : vector<16x128xf32>
    %107 = arith.mulf %106, %37 : vector<16x128xf32>
    %cst_49 = arith.constant 5.000000e-01 : f32
    %108 = vector.broadcast %cst_49 : f32 to vector<16x128xf32>
    %109 = arith.mulf %108, %107 : vector<16x128xf32>
    %110 = math.tanh %109 : vector<16x128xf32>
    %cst_50 = arith.constant 1.000000e+00 : f32
    %111 = vector.broadcast %cst_50 : f32 to vector<16x128xf32>
    %112 = arith.addf %110, %111 : vector<16x128xf32>
    %cst_51 = arith.constant 5.000000e-01 : f32
    %113 = vector.broadcast %cst_51 : f32 to vector<16x128xf32>
    %114 = arith.mulf %113, %112 : vector<16x128xf32>
    %115 = arith.mulf %106, %114 : vector<16x128xf32>
    %c1_52 = arith.constant 1 : index
    %c0_53 = arith.constant 0 : index
    %c0_54 = arith.constant 0 : index
    %116 = vector.load %arg4[%c1_52, %c0_53, %c0_54] : memref<4x128x128xbf16, #tpu.memory_space<vmem>>, vector<1x128x128xbf16>
    %117 = vector.shape_cast %116 : vector<1x128x128xbf16> to vector<128x128xbf16>
    %c4 = arith.constant 4 : index
    %c0_55 = arith.constant 0 : index
    %118 = vector.load %arg7[%c4, %c0_55] : memref<16x128xf32, #tpu.memory_space<vmem>>, vector<1x128xf32>
    %c5 = arith.constant 5 : index
    %c0_56 = arith.constant 0 : index
    %119 = vector.load %arg7[%c5, %c0_56] : memref<16x128xf32, #tpu.memory_space<vmem>>, vector<1x128xf32>
    %120 = arith.truncf %115 : vector<16x128xf32> to vector<16x128xbf16>
    %cst_57 = arith.constant dense<0.000000e+00> : vector<16x128xf32>
    %121 = tpu.matmul %120, %117, %cst_57 {dimension_numbers = #tpu.dot_dimension_numbers<[1], [0], [0], [1], [0, 0, 1, 1], [], []>} : vector<16x128xbf16>, vector<128x128xbf16>, vector<16x128xf32> -> vector<16x128xf32>
    %122 = vector.broadcast %118 : vector<1x128xf32> to vector<16x128xf32>
    %123 = arith.addf %121, %122 : vector<16x128xf32>
    %124 = vector.broadcast %0 : vector<16x1xf32> to vector<16x128xf32>
    %125 = vector.broadcast %119 : vector<1x128xf32> to vector<16x128xf32>
    %126 = arith.mulf %124, %125 : vector<16x128xf32>
    %127 = arith.addf %123, %126 : vector<16x128xf32>
    %128 = arith.mulf %127, %55 : vector<16x128xf32>
    %cst_58 = arith.constant 5.000000e-01 : f32
    %129 = vector.broadcast %cst_58 : f32 to vector<16x128xf32>
    %130 = arith.mulf %129, %128 : vector<16x128xf32>
    %131 = math.tanh %130 : vector<16x128xf32>
    %cst_59 = arith.constant 1.000000e+00 : f32
    %132 = vector.broadcast %cst_59 : f32 to vector<16x128xf32>
    %133 = arith.addf %131, %132 : vector<16x128xf32>
    %cst_60 = arith.constant 5.000000e-01 : f32
    %134 = vector.broadcast %cst_60 : f32 to vector<16x128xf32>
    %135 = arith.mulf %134, %133 : vector<16x128xf32>
    %136 = arith.mulf %127, %135 : vector<16x128xf32>
    %c2_61 = arith.constant 2 : index
    %c0_62 = arith.constant 0 : index
    %c0_63 = arith.constant 0 : index
    %137 = vector.load %arg4[%c2_61, %c0_62, %c0_63] : memref<4x128x128xbf16, #tpu.memory_space<vmem>>, vector<1x128x128xbf16>
    %138 = vector.shape_cast %137 : vector<1x128x128xbf16> to vector<128x128xbf16>
    %c6 = arith.constant 6 : index
    %c0_64 = arith.constant 0 : index
    %139 = vector.load %arg7[%c6, %c0_64] : memref<16x128xf32, #tpu.memory_space<vmem>>, vector<1x128xf32>
    %c7 = arith.constant 7 : index
    %c0_65 = arith.constant 0 : index
    %140 = vector.load %arg7[%c7, %c0_65] : memref<16x128xf32, #tpu.memory_space<vmem>>, vector<1x128xf32>
    %141 = arith.truncf %136 : vector<16x128xf32> to vector<16x128xbf16>
    %cst_66 = arith.constant dense<0.000000e+00> : vector<16x128xf32>
    %142 = tpu.matmul %141, %138, %cst_66 {dimension_numbers = #tpu.dot_dimension_numbers<[1], [0], [0], [1], [0, 0, 1, 1], [], []>} : vector<16x128xbf16>, vector<128x128xbf16>, vector<16x128xf32> -> vector<16x128xf32>
    %143 = vector.broadcast %139 : vector<1x128xf32> to vector<16x128xf32>
    %144 = arith.addf %142, %143 : vector<16x128xf32>
    %145 = vector.broadcast %0 : vector<16x1xf32> to vector<16x128xf32>
    %146 = vector.broadcast %140 : vector<1x128xf32> to vector<16x128xf32>
    %147 = arith.mulf %145, %146 : vector<16x128xf32>
    %148 = arith.addf %144, %147 : vector<16x128xf32>
    %149 = arith.mulf %148, %56 : vector<16x128xf32>
    %cst_67 = arith.constant 5.000000e-01 : f32
    %150 = vector.broadcast %cst_67 : f32 to vector<16x128xf32>
    %151 = arith.mulf %150, %149 : vector<16x128xf32>
    %152 = math.tanh %151 : vector<16x128xf32>
    %cst_68 = arith.constant 1.000000e+00 : f32
    %153 = vector.broadcast %cst_68 : f32 to vector<16x128xf32>
    %154 = arith.addf %152, %153 : vector<16x128xf32>
    %cst_69 = arith.constant 5.000000e-01 : f32
    %155 = vector.broadcast %cst_69 : f32 to vector<16x128xf32>
    %156 = arith.mulf %155, %154 : vector<16x128xf32>
    %157 = arith.mulf %148, %156 : vector<16x128xf32>
    %c3_70 = arith.constant 3 : index
    %c0_71 = arith.constant 0 : index
    %c0_72 = arith.constant 0 : index
    %158 = vector.load %arg4[%c3_70, %c0_71, %c0_72] : memref<4x128x128xbf16, #tpu.memory_space<vmem>>, vector<1x128x128xbf16>
    %159 = vector.shape_cast %158 : vector<1x128x128xbf16> to vector<128x128xbf16>
    %c8 = arith.constant 8 : index
    %c0_73 = arith.constant 0 : index
    %160 = vector.load %arg7[%c8, %c0_73] : memref<16x128xf32, #tpu.memory_space<vmem>>, vector<1x128xf32>
    %c9 = arith.constant 9 : index
    %c0_74 = arith.constant 0 : index
    %161 = vector.load %arg7[%c9, %c0_74] : memref<16x128xf32, #tpu.memory_space<vmem>>, vector<1x128xf32>
    %162 = arith.truncf %157 : vector<16x128xf32> to vector<16x128xbf16>
    %cst_75 = arith.constant dense<0.000000e+00> : vector<16x128xf32>
    %163 = tpu.matmul %162, %159, %cst_75 {dimension_numbers = #tpu.dot_dimension_numbers<[1], [0], [0], [1], [0, 0, 1, 1], [], []>} : vector<16x128xbf16>, vector<128x128xbf16>, vector<16x128xf32> -> vector<16x128xf32>
    %164 = vector.broadcast %160 : vector<1x128xf32> to vector<16x128xf32>
    %165 = arith.addf %163, %164 : vector<16x128xf32>
    %166 = vector.broadcast %0 : vector<16x1xf32> to vector<16x128xf32>
    %167 = vector.broadcast %161 : vector<1x128xf32> to vector<16x128xf32>
    %168 = arith.mulf %166, %167 : vector<16x128xf32>
    %169 = arith.addf %165, %168 : vector<16x128xf32>
    %170 = arith.mulf %169, %74 : vector<16x128xf32>
    %cst_76 = arith.constant 5.000000e-01 : f32
    %171 = vector.broadcast %cst_76 : f32 to vector<16x128xf32>
    %172 = arith.mulf %171, %170 : vector<16x128xf32>
    %173 = math.tanh %172 : vector<16x128xf32>
    %cst_77 = arith.constant 1.000000e+00 : f32
    %174 = vector.broadcast %cst_77 : f32 to vector<16x128xf32>
    %175 = arith.addf %173, %174 : vector<16x128xf32>
    %cst_78 = arith.constant 5.000000e-01 : f32
    %176 = vector.broadcast %cst_78 : f32 to vector<16x128xf32>
    %177 = arith.mulf %176, %175 : vector<16x128xf32>
    %178 = arith.mulf %169, %177 : vector<16x128xf32>
    %c0_79 = arith.constant 0 : index
    %c0_80 = arith.constant 0 : index
    %179 = vector.load %arg5[%c0_79, %c0_80] : memref<128x16xbf16, #tpu.memory_space<vmem>>, vector<128x16xbf16>
    %c10 = arith.constant 10 : index
    %c0_81 = arith.constant 0 : index
    %180 = vector.load %arg7[%c10, %c0_81] : memref<16x128xf32, #tpu.memory_space<vmem>>, vector<1x128xf32>
    %181 = vector.extract_strided_slice %180 {offsets = [0, 0], sizes = [1, 16], strides = [1, 1]} : vector<1x128xf32> to vector<1x16xf32>
    %c11 = arith.constant 11 : index
    %c0_82 = arith.constant 0 : index
    %182 = vector.load %arg7[%c11, %c0_82] : memref<16x128xf32, #tpu.memory_space<vmem>>, vector<1x128xf32>
    %183 = vector.extract_strided_slice %182 {offsets = [0, 0], sizes = [1, 16], strides = [1, 1]} : vector<1x128xf32> to vector<1x16xf32>
    %184 = arith.truncf %178 : vector<16x128xf32> to vector<16x128xbf16>
    %cst_83 = arith.constant dense<0.000000e+00> : vector<16x16xf32>
    %185 = tpu.matmul %184, %179, %cst_83 {dimension_numbers = #tpu.dot_dimension_numbers<[1], [0], [0], [1], [0, 0, 1, 1], [], []>} : vector<16x128xbf16>, vector<128x16xbf16>, vector<16x16xf32> -> vector<16x16xf32>
    %186 = vector.broadcast %181 : vector<1x16xf32> to vector<16x16xf32>
    %187 = arith.addf %185, %186 : vector<16x16xf32>
    %188 = vector.broadcast %0 : vector<16x1xf32> to vector<16x16xf32>
    %189 = vector.broadcast %183 : vector<1x16xf32> to vector<16x16xf32>
    %190 = arith.mulf %188, %189 : vector<16x16xf32>
    %191 = arith.addf %187, %190 : vector<16x16xf32>
    %c0_84 = arith.constant 0 : index
    %c0_85 = arith.constant 0 : index
    %192 = vector.load %arg9[%c0_84, %c0_85] : memref<16x16xf32, #tpu.memory_space<vmem>>, vector<16x16xf32>
    tpu.vector_store %arg9[%c0_84, %c0_85], %191 {strides = array<i32>} : memref<16x16xf32, #tpu.memory_space<vmem>>, vector<16x16xf32>,
    return
  }
  func.func @transform_0(%arg0: i32) -> (i32, i32) {
    %c0_i32 = arith.constant 0 : i32
    %c0_i32_0 = arith.constant 0 : i32
    return %arg0, %c0_i32 : i32, i32
  }
  func.func @transform_1(%arg0: i32) -> (i32, i32) {
    %c0_i32 = arith.constant 0 : i32
    %c0_i32_0 = arith.constant 0 : i32
    return %arg0, %c0_i32 : i32, i32
  }
  func.func @transform_2(%arg0: i32) -> (i32, i32) {
    %c0_i32 = arith.constant 0 : i32
    %c0_i32_0 = arith.constant 0 : i32
    %c0_i32_1 = arith.constant 0 : i32
    return %c0_i32, %c0_i32_0 : i32, i32
  }
  func.func @transform_3(%arg0: i32) -> (i32, i32, i32) {
    %c0_i32 = arith.constant 0 : i32
    %c0_i32_0 = arith.constant 0 : i32
    %c0_i32_1 = arith.constant 0 : i32
    %c0_i32_2 = arith.constant 0 : i32
    return %c0_i32, %c0_i32_0, %c0_i32_1 : i32, i32, i32
  }
  func.func @transform_4(%arg0: i32) -> (i32, i32) {
    %c0_i32 = arith.constant 0 : i32
    %c0_i32_0 = arith.constant 0 : i32
    %c0_i32_1 = arith.constant 0 : i32
    return %c0_i32, %c0_i32_0 : i32, i32
  }
  func.func @transform_5(%arg0: i32) -> (i32, i32, i32) {
    %c0_i32 = arith.constant 0 : i32
    %c0_i32_0 = arith.constant 0 : i32
    %c0_i32_1 = arith.constant 0 : i32
    %c0_i32_2 = arith.constant 0 : i32
    return %c0_i32, %c0_i32_0, %c0_i32_1 : i32, i32, i32
  }
  func.func @transform_6(%arg0: i32) -> (i32, i32) {
    %c0_i32 = arith.constant 0 : i32
    %c0_i32_0 = arith.constant 0 : i32
    %c0_i32_1 = arith.constant 0 : i32
    return %c0_i32, %c0_i32_0 : i32, i32
  }
  func.func @transform_7(%arg0: i32) -> (i32, i32) {
    %c0_i32 = arith.constant 0 : i32
    %c0_i32_0 = arith.constant 0 : i32
    %c0_i32_1 = arith.constant 0 : i32
    return %c0_i32, %c0_i32_0 : i32, i32
  }
  func.func @transform_8(%arg0: i32) -> (i32, i32) {
    %c0_i32 = arith.constant 0 : i32
    %c0_i32_0 = arith.constant 0 : i32
    return %arg0, %c0_i32 : i32, i32
  }
}

</mosaic_0001>

<llo_original>
// kernel: state_mlp_forward.1
$region0: #{state_mlp_forward.1}
  #allocation0 [shape = 'u32[]', space=smem, size = 0x4, offset = 0x4, fixed_abs, tag = 'smem constant byte address 0x4 - core index']
  #allocation1 [shape = 'u32[72,128]{1,0:T(1,128)}', space=vmem, size = 0x9000, scoped, tag = 'internal scratch']
  %s0 = inlined_call_operand.vmem [shape: bf16[16,32], index: 0, kind: input, shape index: {}]
  %s1 = inlined_call_operand.vmem [shape: f32[16,1], index: 1, kind: input, shape index: {}]
  %s2 = inlined_call_operand.vmem [shape: bf16[32,128], index: 2, kind: input, shape index: {}]
  %s3 = inlined_call_operand.hbm [shape: bf16[4,128,128], index: 3, kind: input, shape index: {}]
  %s4 = inlined_call_operand.vmem [shape: bf16[128,16], index: 4, kind: input, shape index: {}]
  %s5 = inlined_call_operand.hbm [shape: bf16[3,128,256], index: 5, kind: input, shape index: {}]
  %s6 = inlined_call_operand.vmem [shape: f32[16,128], index: 6, kind: input, shape index: {}]
  %s7 = inlined_call_operand.vmem [shape: f32[8,640], index: 7, kind: input, shape index: {}]
  %s8 = inlined_call_operand.vmem [shape: f32[16,16], index: 8, kind: output, shape index: {}]
  %s9 = sld [smem:[#allocation0]]
  $region50: #{state_mlp_forward.1} parent=0
    _
  %s11 = ssub.s32 1, %s9
  %s12 = scalar_select 0, %s11, %s9
  $region1: #{state_mlp_forward.1} parent=0
    #allocation2 [shape = 'u8[131072]{0}', space=vmem, size = 0x20000, scoped, tag = 'input window, operand 3, single buffered']
    #allocation3 [shape = 's32[1]{0}', space=sflag, size = 0x4, scoped, tag = 'scoped memory for state_mlp_forward.1']
    #allocation4 [shape = 'u8[196608]{0}', space=vmem, size = 0x30000, scoped, tag = 'input window, operand 5, single buffered']
    #allocation5 [shape = 's32[1]{0}', space=sflag, size = 0x4, scoped, tag = 'scoped memory for state_mlp_forward.1']
    %13 = vsyncpa [#allocation3], 0
    %14 = vsyncpa [#allocation5], 0
    // Predicated region
    $region2: #{state_mlp_forward.1} parent=1 // pred_check
      _
    $region3: #{state_mlp_forward.1} parent=1 // pred_check_branch
      %16 = sbr.rel (0) target = $region5
    $region4: #{state_mlp_forward.1} parent=1 // pred_region
      _
    $region5: #{state_mlp_forward.1} parent=1 // pred_fallthru
      _
    // Predicated region
    $region6: #{state_mlp_forward.1} parent=1 // pred_check
      _
    $region7: #{state_mlp_forward.1} parent=1 // pred_check_branch
      %18 = sbr.rel (0) target = $region9
    $region8: #{state_mlp_forward.1} parent=1 // pred_region
      _
    $region9: #{state_mlp_forward.1} parent=1 // pred_fallthru
      _
    // Predicated region
    $region10: #{state_mlp_forward.1} parent=1 // pred_check
      _
    $region11: #{state_mlp_forward.1} parent=1 // pred_check_branch
      %20 = sbr.rel (0) target = $region13
    $region12: #{state_mlp_forward.1} parent=1 // pred_region
      _
    $region13: #{state_mlp_forward.1} parent=1 // pred_fallthru
      _
    // Predicated region
    $region14: #{state_mlp_forward.1} parent=1 // pred_check
      _
    $region15: #{state_mlp_forward.1} parent=1 // pred_check_branch
      %22 = sbr.rel (0) target = $region17
    $region16: #{state_mlp_forward.1} parent=1 // pred_region
      %24 = vsyncadd [#allocation3], 0
      %s25 = sshll.u32 %s3, 4
      %s26 = int_to_ptr.hbm [resolvable:$true] %s25
      %s27 = sshll.u32 [#allocation2], 4
      %s28 = int_to_ptr.vmem [resolvable:$true] %s27
      %33 = dma.hbm_to_vmem [thread:$0]  %s26, 4096, %s28, [#allocation3], 64, 64, 4
    $region17: #{state_mlp_forward.1} parent=1 // pred_fallthru
      _
    // Predicated region
    $region18: #{state_mlp_forward.1} parent=1 // pred_check
      _
    $region19: #{state_mlp_forward.1} parent=1 // pred_check_branch
      %35 = sbr.rel (0) target = $region21
    $region20: #{state_mlp_forward.1} parent=1 // pred_region
      _
    $region21: #{state_mlp_forward.1} parent=1 // pred_fallthru
      _
    // Predicated region
    $region22: #{state_mlp_forward.1} parent=1 // pred_check
      _
    $region23: #{state_mlp_forward.1} parent=1 // pred_check_branch
      %37 = sbr.rel (0) target = $region25
    $region24: #{state_mlp_forward.1} parent=1 // pred_region
      %39 = vsyncadd [#allocation5], 0
      %s40 = sshll.u32 %s5, 4
      %s41 = int_to_ptr.hbm [resolvable:$true] %s40
      %s42 = sshll.u32 [#allocation4], 4
      %s43 = int_to_ptr.vmem [resolvable:$true] %s42
      %48 = dma.hbm_to_vmem [thread:$0]  %s41, 6144, %s43, [#allocation5], 128, 128, 8
    $region25: #{state_mlp_forward.1} parent=1 // pred_fallthru
      _
    // Predicated region
    $region26: #{state_mlp_forward.1} parent=1 // pred_check
      _
    $region27: #{state_mlp_forward.1} parent=1 // pred_check_branch
      %50 = sbr.rel (0) target = $region29
    $region28: #{state_mlp_forward.1} parent=1 // pred_region
      _
    $region29: #{state_mlp_forward.1} parent=1 // pred_fallthru
      _
    // Predicated region
    $region30: #{state_mlp_forward.1} parent=1 // pred_check
      _
    $region31: #{state_mlp_forward.1} parent=1 // pred_check_branch
      %52 = sbr.rel (0) target = $region33
    $region32: #{state_mlp_forward.1} parent=1 // pred_region
      _
    $region33: #{state_mlp_forward.1} parent=1 // pred_fallthru
      _
    // Predicated region
    $region34: #{state_mlp_forward.1} parent=1 // pred_check
      _
    $region35: #{state_mlp_forward.1} parent=1 // pred_check_branch
      %54 = sbr.rel (0) target = $region37
    $region36: #{state_mlp_forward.1} parent=1 // pred_region
      %56 = dma.done [#allocation3], 4096
    $region37: #{state_mlp_forward.1} parent=1 // pred_fallthru
      _
    // Predicated region
    $region38: #{state_mlp_forward.1} parent=1 // pred_check
      _
    $region39: #{state_mlp_forward.1} parent=1 // pred_check_branch
      %58 = sbr.rel (0) target = $region41
    $region40: #{state_mlp_forward.1} parent=1 // pred_region
      %60 = dma.done [#allocation5], 6144
    $region41: #{state_mlp_forward.1} parent=1 // pred_fallthru
      _
    %v62 = vld [vmem:[%s1] sm:$0xff]
    %v63 = vld [vmem:[%s1 + $0x8] sm:$0xff]
    %v64 = vld [vmem:[%s7] ss:$8 sm:$0x7]
    %s65 = scalar_lea.vmem %s7, 1
    %v66 = vld [vmem:[%s65] ss:$8 sm:$0x7]
    %68 = vset.pattern.permute.xlu0 0
    %69 = vperm.xlu0 %68, %v62
    %v70 = vpop.permute.xlu0 %69
    %73 = vset.pattern.permute.xlu0 0
    %74 = vperm.xlu0 %73, %v63
    %v75 = vpop.permute.xlu0 %74
    %v78 = vperm.slane %v64, 0
    %v79 = vperm.slane %v64, 1
    %v80 = vperm.slane %v64, 2
    %v84 = vmul.f32 %v70, %v78
    %v85 = vmul.f32 %v70, %v79
    %v86 = vmul.f32 %v70, %v80
    %v87 = vmul.f32 %v75, %v78
    %v88 = vmul.f32 %v75, %v79
    %v89 = vmul.f32 %v75, %v80
    %v91 = vperm.slane %v66, 0
    %v92 = vperm.slane %v66, 1
    %v93 = vperm.slane %v66, 2
    %v97 = vadd.f32 %v84, %v91
    %v98 = vadd.f32 %v85, %v92
    %v99 = vadd.f32 %v86, %v93
    %v100 = vadd.f32 %v87, %v91
    %v101 = vadd.f32 %v88, %v92
    %v102 = vadd.f32 %v89, %v93
    %v103 = vmax.f32 %v97, 0.0
    %v104 = vmax.f32 %v98, 0.0
    %v105 = vmax.f32 %v99, 0.0
    %v106 = vmax.f32 %v100, 0.0
    %v107 = vmax.f32 %v101, 0.0
    %v108 = vmax.f32 %v102, 0.0
    %v109 = vand.u32 2147483647, %v97
    %v110 = vand.u32 2147483647, %v98
    %v111 = vand.u32 2147483647, %v99
    %v112 = vand.u32 2147483647, %v100
    %v113 = vand.u32 2147483647, %v101
    %v114 = vand.u32 2147483647, %v102
    %v115 = vsub.f32 0.0, %v109
    %v116 = vsub.f32 0.0, %v110
    %v117 = vsub.f32 0.0, %v111
    %v118 = vsub.f32 0.0, %v112
    %v119 = vsub.f32 0.0, %v113
    %v120 = vsub.f32 0.0, %v114
    %v121 = vmul.f32 %v115, 1.442695
    %v122 = vpow.pop %v121
    %v123 = vmul.f32 %v116, 1.442695
    %v124 = vpow.pop %v123
    %v125 = vmul.f32 %v117, 1.442695
    %v126 = vpow.pop %v125
    %v127 = vmul.f32 %v118, 1.442695
    %v128 = vpow.pop %v127
    %v129 = vmul.f32 %v119, 1.442695
    %v130 = vpow.pop %v129
    %v131 = vmul.f32 %v120, 1.442695
    %v132 = vpow.pop %v131
    %v133 = vadd.f32 %v122, 1.0
    %v134 = vadd.f32 %v124, 1.0
    %v135 = vadd.f32 %v126, 1.0
    %v136 = vadd.f32 %v128, 1.0
    %v137 = vadd.f32 %v130, 1.0
    %v138 = vadd.f32 %v132, 1.0
    %v139 = vlog2.pop %v133
    %v140 = vmul.f32 %v139, 0.6931472
    %v141 = vlog2.pop %v134
    %v142 = vmul.f32 %v141, 0.6931472
    %v143 = vlog2.pop %v135
    %v144 = vmul.f32 %v143, 0.6931472
    %v145 = vlog2.pop %v136
    %v146 = vmul.f32 %v145, 0.6931472
    %v147 = vlog2.pop %v137
    %v148 = vmul.f32 %v147, 0.6931472
    %v149 = vlog2.pop %v138
    %v150 = vmul.f32 %v149, 0.6931472
    %v151 = vadd.f32 %v103, %v140
    %v152 = vadd.f32 %v104, %v142
    %v153 = vadd.f32 %v105, %v144
    %v154 = vadd.f32 %v106, %v146
    %v155 = vadd.f32 %v107, %v148
    %v156 = vadd.f32 %v108, %v150
    %v157 = vpack.c.bf16 %v152, %v151
    %v158 = vpack.c.bf16 %v153, %v153
    %v159 = vpack.c.bf16 %v155, %v154
    %v160 = vpack.c.bf16 %v156, %v156
    %v161 = vld [vmem:[#allocation4] sm:$0xff]
    %v162 = vld [vmem:[#allocation4 + $0x8] sm:$0xff]
    %v163 = vld [vmem:[#allocation4 + $0x10] sm:$0xff]
    %v164 = vld [vmem:[#allocation4 + $0x18] sm:$0xff]
    %v165 = vld [vmem:[#allocation4 + $0x20] sm:$0xff]
    %v166 = vld [vmem:[#allocation4 + $0x28] sm:$0xff]
    %v167 = vld [vmem:[#allocation4 + $0x30] sm:$0xff]
    %v168 = vld [vmem:[#allocation4 + $0x38] sm:$0xff]
    %v169 = vld [vmem:[#allocation4 + $0x40] sm:$0xff]
    %v170 = vld [vmem:[#allocation4 + $0x48] sm:$0xff]
    %v171 = vld [vmem:[#allocation4 + $0x50] sm:$0xff]
    %v172 = vld [vmem:[#allocation4 + $0x58] sm:$0xff]
    %v173 = vld [vmem:[#allocation4 + $0x60] sm:$0xff]
    %v174 = vld [vmem:[#allocation4 + $0x68] sm:$0xff]
    %v175 = vld [vmem:[#allocation4 + $0x70] sm:$0xff]
    %v176 = vld [vmem:[#allocation4 + $0x78] sm:$0xff]
    %s177 = scalar_lea.vmem %s7, 2
    %v178 = vld [vmem:[%s177] ss:$8 sm:$0x3]
    %v180 = vperm.slane %v178, 0
    %v181 = vperm.slane %v178, 1
    %v186 = vunpack.c.l.b16 %v157
    %v187 = vunpack.c.l.b16 %v159
    %v188 = vpack.c.b16 %v187, %v186
    %v206 = vunpack.c.l.b16 %v161
    %v207 = vunpack.c.h.b16 %v161
    %v208 = vunpack.c.l.b16 %v162
    %v209 = vunpack.c.h.b16 %v162
    %v210 = vunpack.c.l.b16 %v163
    %v211 = vunpack.c.h.b16 %v163
    %v212 = vunpack.c.l.b16 %v164
    %v213 = vunpack.c.h.b16 %v164
    %v214 = vunpack.c.l.b16 %v165
    %v215 = vunpack.c.h.b16 %v165
    %v216 = vunpack.c.l.b16 %v166
    %v217 = vunpack.c.h.b16 %v166
    %v218 = vunpack.c.l.b16 %v167
    %v219 = vunpack.c.h.b16 %v167
    %v220 = vunpack.c.l.b16 %v168
    %v221 = vunpack.c.h.b16 %v168
    %v222 = vunpack.c.l.b16 %v169
    %v223 = vunpack.c.h.b16 %v169
    %v224 = vunpack.c.l.b16 %v170
    %v225 = vunpack.c.h.b16 %v170
    %v226 = vunpack.c.l.b16 %v171
    %v227 = vunpack.c.h.b16 %v171
    %v228 = vunpack.c.l.b16 %v172
    %v229 = vunpack.c.h.b16 %v172
    %v230 = vunpack.c.l.b16 %v173
    %v231 = vunpack.c.h.b16 %v173
    %v232 = vunpack.c.l.b16 %v174
    %v233 = vunpack.c.h.b16 %v174
    %v234 = vunpack.c.l.b16 %v175
    %v235 = vunpack.c.h.b16 %v175
    %v236 = vunpack.c.l.b16 %v176
    %v237 = vunpack.c.h.b16 %v176
    %v238 = vpack.c.b16 %v208, %v206
    %v239 = vpack.c.b16 %v209, %v207
    %v240 = vpack.c.b16 %v212, %v210
    %v241 = vpack.c.b16 %v213, %v211
    %v242 = vpack.c.b16 %v216, %v214
    %v243 = vpack.c.b16 %v217, %v215
    %v244 = vpack.c.b16 %v220, %v218
    %v245 = vpack.c.b16 %v221, %v219
    %v246 = vpack.c.b16 %v224, %v222
    %v247 = vpack.c.b16 %v225, %v223
    %v248 = vpack.c.b16 %v228, %v226
    %v249 = vpack.c.b16 %v229, %v227
    %v250 = vpack.c.b16 %v232, %v230
    %v251 = vpack.c.b16 %v233, %v231
    %v252 = vpack.c.b16 %v236, %v234
    %v253 = vpack.c.b16 %v237, %v235
    %270 = vmatpush.bf16.msra.mxu0 %v252
    %271 = vmatpush.bf16.msra.mxu0 %v250
    %272 = vmatpush.bf16.msra.mxu0 %v248
    %273 = vmatpush.bf16.msra.mxu0 %v246
    %274 = vmatpush.bf16.msra.mxu0 %v244
    %275 = vmatpush.bf16.msra.mxu0 %v242
    %276 = vmatpush.bf16.msra.mxu0 %v240
    %277 = vmatpush.bf16.msra.mxu0 %v238
    %278 = vmatmul.bf16.gmra.mxu0 %v188
    %v279 = vpop.f32.mrf.mxu0
    %v280 = vadd.f32 %v180, %v279
    %v281 = vpop.f32.mrf.mxu0
    %v282 = vadd.f32 %v180, %v281
    %283 = vdwg.mxu0
    %284 = vmatpush.bf16.msra.mxu0 %v253
    %285 = vmatpush.bf16.msra.mxu0 %v251
    %286 = vmatpush.bf16.msra.mxu0 %v249
    %287 = vmatpush.bf16.msra.mxu0 %v247
    %288 = vmatpush.bf16.msra.mxu0 %v245
    %289 = vmatpush.bf16.msra.mxu0 %v243
    %290 = vmatpush.bf16.msra.mxu0 %v241
    %291 = vmatpush.bf16.msra.mxu0 %v239
    %292 = vmatmul.bf16.gmra.mxu0 %v188
    %v293 = vpop.f32.mrf.mxu0
    %v294 = vadd.f32 %v181, %v293
    %v295 = vpop.f32.mrf.mxu0
    %v296 = vadd.f32 %v181, %v295
    %297 = vdwg.mxu0
    %v298 = vmax.f32 %v280, 0.0
    %v299 = vmax.f32 %v294, 0.0
    %v300 = vmax.f32 %v282, 0.0
    %v301 = vmax.f32 %v296, 0.0
    %v302 = vand.u32 2147483647, %v280
    %v303 = vand.u32 2147483647, %v294
    %v304 = vand.u32 2147483647, %v282
    %v305 = vand.u32 2147483647, %v296
    %v306 = vsub.f32 0.0, %v302
    %v307 = vsub.f32 0.0, %v303
    %v308 = vsub.f32 0.0, %v304
    %v309 = vsub.f32 0.0, %v305
    %v310 = vmul.f32 %v306, 1.442695
    %v311 = vpow.pop %v310
    %v312 = vmul.f32 %v307, 1.442695
    %v313 = vpow.pop %v312
    %v314 = vmul.f32 %v308, 1.442695
    %v315 = vpow.pop %v314
    %v316 = vmul.f32 %v309, 1.442695
    %v317 = vpow.pop %v316
    %v318 = vadd.f32 %v311, 1.0
    %v319 = vadd.f32 %v313, 1.0
    %v320 = vadd.f32 %v315, 1.0
    %v321 = vadd.f32 %v317, 1.0
    %v322 = vlog2.pop %v318
    %v323 = vmul.f32 %v322, 0.6931472
    %v324 = vlog2.pop %v319
    %v325 = vmul.f32 %v324, 0.6931472
    %v326 = vlog2.pop %v320
    %v327 = vmul.f32 %v326, 0.6931472
    %v328 = vlog2.pop %v321
    %v329 = vmul.f32 %v328, 0.6931472
    %v330 = vadd.f32 %v298, %v323
    %v331 = vadd.f32 %v299, %v325
    %v332 = vadd.f32 %v300, %v327
    %v333 = vadd.f32 %v301, %v329
    %s334 = scalar_lea.vmem [#allocation4], 128
    %v335 = vld [vmem:[%s334] sm:$0xff]
    %v336 = vld [vmem:[%s334 + $0x8] sm:$0xff]
    %v337 = vld [vmem:[%s334 + $0x10] sm:$0xff]
    %v338 = vld [vmem:[%s334 + $0x18] sm:$0xff]
    %v339 = vld [vmem:[%s334 + $0x20] sm:$0xff]
    %v340 = vld [vmem:[%s334 + $0x28] sm:$0xff]
    %v341 = vld [vmem:[%s334 + $0x30] sm:$0xff]
    %v342 = vld [vmem:[%s334 + $0x38] sm:$0xff]
    %v343 = vld [vmem:[%s334 + $0x40] sm:$0xff]
    %v344 = vld [vmem:[%s334 + $0x48] sm:$0xff]
    %v345 = vld [vmem:[%s334 + $0x50] sm:$0xff]
    %v346 = vld [vmem:[%s334 + $0x58] sm:$0xff]
    %v347 = vld [vmem:[%s334 + $0x60] sm:$0xff]
    %v348 = vld [vmem:[%s334 + $0x68] sm:$0xff]
    %v349 = vld [vmem:[%s334 + $0x70] sm:$0xff]
    %v350 = vld [vmem:[%s334 + $0x78] sm:$0xff]
    %s351 = scalar_lea.vmem %s7, 18
    %v352 = vld [vmem:[%s351] ss:$8 sm:$0x3]
    %v354 = vperm.slane %v352, 0
    %v355 = vperm.slane %v352, 1
    %v358 = vunpack.c.h.b16 %v157
    %v359 = vunpack.c.h.b16 %v159
    %v360 = vpack.c.b16 %v359, %v358
    %v378 = vunpack.c.l.b16 %v335
    %v379 = vunpack.c.h.b16 %v335
    %v380 = vunpack.c.l.b16 %v336
    %v381 = vunpack.c.h.b16 %v336
    %v382 = vunpack.c.l.b16 %v337
    %v383 = vunpack.c.h.b16 %v337
    %v384 = vunpack.c.l.b16 %v338
    %v385 = vunpack.c.h.b16 %v338
    %v386 = vunpack.c.l.b16 %v339
    %v387 = vunpack.c.h.b16 %v339
    %v388 = vunpack.c.l.b16 %v340
    %v389 = vunpack.c.h.b16 %v340
    %v390 = vunpack.c.l.b16 %v341
    %v391 = vunpack.c.h.b16 %v341
    %v392 = vunpack.c.l.b16 %v342
    %v393 = vunpack.c.h.b16 %v342
    %v394 = vunpack.c.l.b16 %v343
    %v395 = vunpack.c.h.b16 %v343
    %v396 = vunpack.c.l.b16 %v344
    %v397 = vunpack.c.h.b16 %v344
    %v398 = vunpack.c.l.b16 %v345
    %v399 = vunpack.c.h.b16 %v345
    %v400 = vunpack.c.l.b16 %v346
    %v401 = vunpack.c.h.b16 %v346
    %v402 = vunpack.c.l.b16 %v347
    %v403 = vunpack.c.h.b16 %v347
    %v404 = vunpack.c.l.b16 %v348
    %v405 = vunpack.c.h.b16 %v348
    %v406 = vunpack.c.l.b16 %v349
    %v407 = vunpack.c.h.b16 %v349
    %v408 = vunpack.c.l.b16 %v350
    %v409 = vunpack.c.h.b16 %v350
    %v410 = vpack.c.b16 %v380, %v378
    %v411 = vpack.c.b16 %v381, %v379
    %v412 = vpack.c.b16 %v384, %v382
    %v413 = vpack.c.b16 %v385, %v383
    %v414 = vpack.c.b16 %v388, %v386
    %v415 = vpack.c.b16 %v389, %v387
    %v416 = vpack.c.b16 %v392, %v390
    %v417 = vpack.c.b16 %v393, %v391
    %v418 = vpack.c.b16 %v396, %v394
    %v419 = vpack.c.b16 %v397, %v395
    %v420 = vpack.c.b16 %v400, %v398
    %v421 = vpack.c.b16 %v401, %v399
    %v422 = vpack.c.b16 %v404, %v402
    %v423 = vpack.c.b16 %v405, %v403
    %v424 = vpack.c.b16 %v408, %v406
    %v425 = vpack.c.b16 %v409, %v407
    %442 = vmatpush.bf16.msra.mxu0 %v424
    %443 = vmatpush.bf16.msra.mxu0 %v422
    %444 = vmatpush.bf16.msra.mxu0 %v420
    %445 = vmatpush.bf16.msra.mxu0 %v418
    %446 = vmatpush.bf16.msra.mxu0 %v416
    %447 = vmatpush.bf16.msra.mxu0 %v414
    %448 = vmatpush.bf16.msra.mxu0 %v412
    %449 = vmatpush.bf16.msra.mxu0 %v410
    %450 = vmatmul.bf16.gmra.mxu0 %v360
    %v451 = vpop.f32.mrf.mxu0
    %v452 = vadd.f32 %v354, %v451
    %v453 = vpop.f32.mrf.mxu0
    %v454 = vadd.f32 %v354, %v453
    %455 = vdwg.mxu0
    %456 = vmatpush.bf16.msra.mxu0 %v425
    %457 = vmatpush.bf16.msra.mxu0 %v423
    %458 = vmatpush.bf16.msra.mxu0 %v421
    %459 = vmatpush.bf16.msra.mxu0 %v419
    %460 = vmatpush.bf16.msra.mxu0 %v417
    %461 = vmatpush.bf16.msra.mxu0 %v415
    %462 = vmatpush.bf16.msra.mxu0 %v413
    %463 = vmatpush.bf16.msra.mxu0 %v411
    %464 = vmatmul.bf16.gmra.mxu0 %v360
    %v465 = vpop.f32.mrf.mxu0
    %v466 = vadd.f32 %v355, %v465
    %v467 = vpop.f32.mrf.mxu0
    %v468 = vadd.f32 %v355, %v467
    %469 = vdwg.mxu0
    %v470 = vmax.f32 %v452, 0.0
    %v471 = vmax.f32 %v466, 0.0
    %v472 = vmax.f32 %v454, 0.0
    %v473 = vmax.f32 %v468, 0.0
    %v474 = vand.u32 2147483647, %v452
    %v475 = vand.u32 2147483647, %v466
    %v476 = vand.u32 2147483647, %v454
    %v477 = vand.u32 2147483647, %v468
    %v478 = vsub.f32 0.0, %v474
    %v479 = vsub.f32 0.0, %v475
    %v480 = vsub.f32 0.0, %v476
    %v481 = vsub.f32 0.0, %v477
    %v482 = vmul.f32 %v478, 1.442695
    %v483 = vpow.pop %v482
    %v484 = vmul.f32 %v479, 1.442695
    %v485 = vpow.pop %v484
    %v486 = vmul.f32 %v480, 1.442695
    %v487 = vpow.pop %v486
    %v488 = vmul.f32 %v481, 1.442695
    %v489 = vpow.pop %v488
    %v490 = vadd.f32 %v483, 1.0
    %v491 = vadd.f32 %v485, 1.0
    %v492 = vadd.f32 %v487, 1.0
    %v493 = vadd.f32 %v489, 1.0
    %v494 = vlog2.pop %v490
    %v495 = vmul.f32 %v494, 0.6931472
    %v496 = vlog2.pop %v491
    %v497 = vmul.f32 %v496, 0.6931472
    %v498 = vlog2.pop %v492
    %v499 = vmul.f32 %v498, 0.6931472
    %v500 = vlog2.pop %v493
    %v501 = vmul.f32 %v500, 0.6931472
    %v502 = vadd.f32 %v470, %v495
    %v503 = vadd.f32 %v471, %v497
    %v504 = vadd.f32 %v472, %v499
    %v505 = vadd.f32 %v473, %v501
    %s506 = scalar_lea.vmem [#allocation4], 256
    %v507 = vld [vmem:[%s506] sm:$0xff]
    %v508 = vld [vmem:[%s506 + $0x8] sm:$0xff]
    %v509 = vld [vmem:[%s506 + $0x10] sm:$0xff]
    %v510 = vld [vmem:[%s506 + $0x18] sm:$0xff]
    %v511 = vld [vmem:[%s506 + $0x20] sm:$0xff]
    %v512 = vld [vmem:[%s506 + $0x28] sm:$0xff]
    %v513 = vld [vmem:[%s506 + $0x30] sm:$0xff]
    %v514 = vld [vmem:[%s506 + $0x38] sm:$0xff]
    %v515 = vld [vmem:[%s506 + $0x40] sm:$0xff]
    %v516 = vld [vmem:[%s506 + $0x48] sm:$0xff]
    %v517 = vld [vmem:[%s506 + $0x50] sm:$0xff]
    %v518 = vld [vmem:[%s506 + $0x58] sm:$0xff]
    %v519 = vld [vmem:[%s506 + $0x60] sm:$0xff]
    %v520 = vld [vmem:[%s506 + $0x68] sm:$0xff]
    %v521 = vld [vmem:[%s506 + $0x70] sm:$0xff]
    %v522 = vld [vmem:[%s506 + $0x78] sm:$0xff]
    %v525 = vunpack.c.l.b16 %v158
    %v526 = vunpack.c.l.b16 %v160
    %v527 = vpack.c.b16 %v526, %v525
    %v545 = vunpack.c.l.b16 %v507
    %v546 = vunpack.c.l.b16 %v508
    %v547 = vunpack.c.l.b16 %v509
    %v548 = vunpack.c.l.b16 %v510
    %v549 = vunpack.c.l.b16 %v511
    %v550 = vunpack.c.l.b16 %v512
    %v551 = vunpack.c.l.b16 %v513
    %v552 = vunpack.c.l.b16 %v514
    %v553 = vunpack.c.l.b16 %v515
    %v554 = vunpack.c.l.b16 %v516
    %v555 = vunpack.c.l.b16 %v517
    %v556 = vunpack.c.l.b16 %v518
    %v557 = vunpack.c.l.b16 %v519
    %v558 = vunpack.c.l.b16 %v520
    %v559 = vunpack.c.l.b16 %v521
    %v560 = vunpack.c.l.b16 %v522
    %v561 = vpack.c.b16 %v546, %v545
    %v562 = vpack.c.b16 %v548, %v547
    %v563 = vpack.c.b16 %v550, %v549
    %v564 = vpack.c.b16 %v552, %v551
    %v565 = vpack.c.b16 %v554, %v553
    %v566 = vpack.c.b16 %v556, %v555
    %v567 = vpack.c.b16 %v558, %v557
    %v568 = vpack.c.b16 %v560, %v559
    %577 = vmatpush.bf16.msra.mxu0 %v568
    %578 = vmatpush.bf16.msra.mxu0 %v567
    %579 = vmatpush.bf16.msra.mxu0 %v566
    %580 = vmatpush.bf16.msra.mxu0 %v565
    %581 = vmatpush.bf16.msra.mxu0 %v564
    %582 = vmatpush.bf16.msra.mxu0 %v563
    %583 = vmatpush.bf16.msra.mxu0 %v562
    %584 = vmatpush.bf16.msra.mxu0 %v561
    %585 = vmatmul.bf16.gmra.mxu0 %v527
    %v586 = vpop.f32.mrf.mxu0
    %v587 = vadd.f32 0.0, %v586
    %v588 = vpop.f32.mrf.mxu0
    %v589 = vadd.f32 0.0, %v588
    %590 = vdwg.mxu0
    %v591 = vld [vmem:[%s7 + $0x22] ss:$0 sm:$0xff]
    %v592 = vadd.f32 %v587, %v591
    %v593 = vadd.f32 %v589, %v591
    %v594 = vmax.f32 %v592, 0.0
    %v595 = vmax.f32 %v593, 0.0
    %v596 = vand.u32 2147483647, %v592
    %v597 = vand.u32 2147483647, %v593
    %v598 = vsub.f32 0.0, %v596
    %v599 = vsub.f32 0.0, %v597
    %v600 = vmul.f32 %v598, 1.442695
    %v601 = vpow.pop %v600
    %v602 = vmul.f32 %v599, 1.442695
    %v603 = vpow.pop %v602
    %v604 = vadd.f32 %v601, 1.0
    %v605 = vadd.f32 %v603, 1.0
    %v606 = vlog2.pop %v604
    %v607 = vmul.f32 %v606, 0.6931472
    %v608 = vlog2.pop %v605
    %v609 = vmul.f32 %v608, 0.6931472
    %v610 = vadd.f32 %v594, %v607
    %v611 = vadd.f32 %v595, %v609
    %v612 = vld [vmem:[%s0] sm:$0xf]
    %v613 = vld [vmem:[%s0 + $0x4] sm:$0xf]
    %v614 = vld [vmem:[%s2] sm:$0xf]
    %v615 = vld [vmem:[%s2 + $0x4] sm:$0xf]
    %v616 = vld [vmem:[%s2 + $0x8] sm:$0xf]
    %v617 = vld [vmem:[%s2 + $0xc] sm:$0xf]
    %v618 = vld [vmem:[%s6] sm:$0x1]
    %v619 = vld [vmem:[%s6 + $0x1] sm:$0x1]
    %v620 = vperm.slane %v618, 0
    %v623 = vunpack.c.l.b16 %v612
    %v624 = vunpack.c.l.b16 %v613
    %v625 = vpack.c.b16 %v624, %v623
    %v630 = vunpack.c.l.b16 %v614
    %v631 = vunpack.c.l.b16 %v615
    %v632 = vunpack.c.l.b16 %v616
    %v633 = vunpack.c.l.b16 %v617
    %v634 = vpack.c.b16 %v631, %v630
    %v635 = vpack.c.b16 %v633, %v632
    %vm638 = vcmask 261120
    %v640 = vsel %vm638, %v625, 0
    %642 = vmatpush.bf16.msra.mxu0 0
    %643 = vmatpush.bf16.msra.mxu0 0
    %644 = vmatpush.bf16.msra.mxu0 0
    %645 = vmatpush.bf16.msra.mxu0 0
    %646 = vmatpush.bf16.msra.mxu0 0
    %647 = vmatpush.bf16.msra.mxu0 0
    %648 = vmatpush.bf16.msra.mxu0 %v635
    %649 = vmatpush.bf16.msra.mxu0 %v634
    %650 = vmatmul.bf16.gmra.mxu0 %v640
    %v651 = vpop.f32.mrf.mxu0
    %v652 = vadd.f32 %v620, %v651
    %v653 = vpop.f32.mrf.mxu0
    %v654 = vadd.f32 %v620, %v653
    %655 = vdwg.mxu0
    %v656 = vperm.slane %v619, 0
    %v657 = vmul.f32 %v70, %v656
    %v658 = vmul.f32 %v75, %v656
    %v659 = vadd.f32 %v652, %v657
    %v660 = vadd.f32 %v654, %v658
    %v661 = vmul.f32 %v659, %v330
    %v662 = vmul.f32 %v660, %v332
    %v663 = vmul.f32 %v661, 0.5
    %v664 = vmul.f32 %v662, 0.5
    %v665 = vtanh.pop %v663
    %v666 = vtanh.pop %v664
    %v667 = vadd.f32 %v665, 1.0
    %v668 = vadd.f32 %v666, 1.0
    %v669 = vmul.f32 %v667, 0.5
    %v670 = vmul.f32 %v668, 0.5
    %v671 = vmul.f32 %v659, %v669
    %v672 = vmul.f32 %v660, %v670
    %v673 = vld [vmem:[#allocation2] sm:$0xf]
    %v674 = vld [vmem:[#allocation2 + $0x4] sm:$0xf]
    %v675 = vld [vmem:[#allocation2 + $0x8] sm:$0xf]
    %v676 = vld [vmem:[#allocation2 + $0xc] sm:$0xf]
    %v677 = vld [vmem:[#allocation2 + $0x10] sm:$0xf]
    %v678 = vld [vmem:[#allocation2 + $0x14] sm:$0xf]
    %v679 = vld [vmem:[#allocation2 + $0x18] sm:$0xf]
    %v680 = vld [vmem:[#allocation2 + $0x1c] sm:$0xf]
    %v681 = vld [vmem:[#allocation2 + $0x20] sm:$0xf]
    %v682 = vld [vmem:[#allocation2 + $0x24] sm:$0xf]
    %v683 = vld [vmem:[#allocation2 + $0x28] sm:$0xf]
    %v684 = vld [vmem:[#allocation2 + $0x2c] sm:$0xf]
    %v685 = vld [vmem:[#allocation2 + $0x30] sm:$0xf]
    %v686 = vld [vmem:[#allocation2 + $0x34] sm:$0xf]
    %v687 = vld [vmem:[#allocation2 + $0x38] sm:$0xf]
    %v688 = vld [vmem:[#allocation2 + $0x3c] sm:$0xf]
    %v689 = vld [vmem:[%s6 + $0x2] sm:$0x1]
    %v690 = vld [vmem:[%s6 + $0x3] sm:$0x1]
    %v691 = vpack.c.bf16 %v672, %v671
    %v692 = vperm.slane %v689, 0
    %v709 = vunpack.c.l.b16 %v673
    %v710 = vunpack.c.l.b16 %v674
    %v711 = vunpack.c.l.b16 %v675
    %v712 = vunpack.c.l.b16 %v676
    %v713 = vunpack.c.l.b16 %v677
    %v714 = vunpack.c.l.b16 %v678
    %v715 = vunpack.c.l.b16 %v679
    %v716 = vunpack.c.l.b16 %v680
    %v717 = vunpack.c.l.b16 %v681
    %v718 = vunpack.c.l.b16 %v682
    %v719 = vunpack.c.l.b16 %v683
    %v720 = vunpack.c.l.b16 %v684
    %v721 = vunpack.c.l.b16 %v685
    %v722 = vunpack.c.l.b16 %v686
    %v723 = vunpack.c.l.b16 %v687
    %v724 = vunpack.c.l.b16 %v688
    %v725 = vpack.c.b16 %v710, %v709
    %v726 = vpack.c.b16 %v712, %v711
    %v727 = vpack.c.b16 %v714, %v713
    %v728 = vpack.c.b16 %v716, %v715
    %v729 = vpack.c.b16 %v718, %v717
    %v730 = vpack.c.b16 %v720, %v719
    %v731 = vpack.c.b16 %v722, %v721
    %v732 = vpack.c.b16 %v724, %v723
    %741 = vmatpush.bf16.msra.mxu0 %v732
    %742 = vmatpush.bf16.msra.mxu0 %v731
    %743 = vmatpush.bf16.msra.mxu0 %v730
    %744 = vmatpush.bf16.msra.mxu0 %v729
    %745 = vmatpush.bf16.msra.mxu0 %v728
    %746 = vmatpush.bf16.msra.mxu0 %v727
    %747 = vmatpush.bf16.msra.mxu0 %v726
    %748 = vmatpush.bf16.msra.mxu0 %v725
    %749 = vmatmul.bf16.gmra.mxu0 %v691
    %v750 = vpop.f32.mrf.mxu0
    %v751 = vadd.f32 %v692, %v750
    %v752 = vpop.f32.mrf.mxu0
    %v753 = vadd.f32 %v692, %v752
    %754 = vdwg.mxu0
    %v755 = vperm.slane %v690, 0
    %v756 = vmul.f32 %v70, %v755
    %v757 = vmul.f32 %v75, %v755
    %v758 = vadd.f32 %v751, %v756
    %v759 = vadd.f32 %v753, %v757
    %v760 = vmul.f32 %v758, %v331
    %v761 = vmul.f32 %v759, %v333
    %v762 = vmul.f32 %v760, 0.5
    %v763 = vmul.f32 %v761, 0.5
    %v764 = vtanh.pop %v762
    %v765 = vtanh.pop %v763
    %v766 = vadd.f32 %v764, 1.0
    %v767 = vadd.f32 %v765, 1.0
    %v768 = vmul.f32 %v766, 0.5
    %v769 = vmul.f32 %v767, 0.5
    %v770 = vmul.f32 %v758, %v768
    %v771 = vmul.f32 %v759, %v769
    %s772 = scalar_lea.vmem [#allocation2], 64
    %v773 = vld [vmem:[%s772] sm:$0xf]
    %v774 = vld [vmem:[%s772 + $0x4] sm:$0xf]
    %v775 = vld [vmem:[%s772 + $0x8] sm:$0xf]
    %v776 = vld [vmem:[%s772 + $0xc] sm:$0xf]
    %v777 = vld [vmem:[%s772 + $0x10] sm:$0xf]
    %v778 = vld [vmem:[%s772 + $0x14] sm:$0xf]
    %v779 = vld [vmem:[%s772 + $0x18] sm:$0xf]
    %v780 = vld [vmem:[%s772 + $0x1c] sm:$0xf]
    %v781 = vld [vmem:[%s772 + $0x20] sm:$0xf]
    %v782 = vld [vmem:[%s772 + $0x24] sm:$0xf]
    %v783 = vld [vmem:[%s772 + $0x28] sm:$0xf]
    %v784 = vld [vmem:[%s772 + $0x2c] sm:$0xf]
    %v785 = vld [vmem:[%s772 + $0x30] sm:$0xf]
    %v786 = vld [vmem:[%s772 + $0x34] sm:$0xf]
    %v787 = vld [vmem:[%s772 + $0x38] sm:$0xf]
    %v788 = vld [vmem:[%s772 + $0x3c] sm:$0xf]
    %v789 = vld [vmem:[%s6 + $0x4] sm:$0x1]
    %v790 = vld [vmem:[%s6 + $0x5] sm:$0x1]
    %v791 = vpack.c.bf16 %v771, %v770
    %v792 = vperm.slane %v789, 0
    %v809 = vunpack.c.l.b16 %v773
    %v810 = vunpack.c.l.b16 %v774
    %v811 = vunpack.c.l.b16 %v775
    %v812 = vunpack.c.l.b16 %v776
    %v813 = vunpack.c.l.b16 %v777
    %v814 = vunpack.c.l.b16 %v778
    %v815 = vunpack.c.l.b16 %v779
    %v816 = vunpack.c.l.b16 %v780
    %v817 = vunpack.c.l.b16 %v781
    %v818 = vunpack.c.l.b16 %v782
    %v819 = vunpack.c.l.b16 %v783
    %v820 = vunpack.c.l.b16 %v784
    %v821 = vunpack.c.l.b16 %v785
    %v822 = vunpack.c.l.b16 %v786
    %v823 = vunpack.c.l.b16 %v787
    %v824 = vunpack.c.l.b16 %v788
    %v825 = vpack.c.b16 %v810, %v809
    %v826 = vpack.c.b16 %v812, %v811
    %v827 = vpack.c.b16 %v814, %v813
    %v828 = vpack.c.b16 %v816, %v815
    %v829 = vpack.c.b16 %v818, %v817
    %v830 = vpack.c.b16 %v820, %v819
    %v831 = vpack.c.b16 %v822, %v821
    %v832 = vpack.c.b16 %v824, %v823
    %841 = vmatpush.bf16.msra.mxu0 %v832
    %842 = vmatpush.bf16.msra.mxu0 %v831
    %843 = vmatpush.bf16.msra.mxu0 %v830
    %844 = vmatpush.bf16.msra.mxu0 %v829
    %845 = vmatpush.bf16.msra.mxu0 %v828
    %846 = vmatpush.bf16.msra.mxu0 %v827
    %847 = vmatpush.bf16.msra.mxu0 %v826
    %848 = vmatpush.bf16.msra.mxu0 %v825
    %849 = vmatmul.bf16.gmra.mxu0 %v791
    %v850 = vpop.f32.mrf.mxu0
    %v851 = vadd.f32 %v792, %v850
    %v852 = vpop.f32.mrf.mxu0
    %v853 = vadd.f32 %v792, %v852
    %854 = vdwg.mxu0
    %v855 = vperm.slane %v790, 0
    %v856 = vmul.f32 %v70, %v855
    %v857 = vmul.f32 %v75, %v855
    %v858 = vadd.f32 %v851, %v856
    %v859 = vadd.f32 %v853, %v857
    %v860 = vmul.f32 %v858, %v502
    %v861 = vmul.f32 %v859, %v504
    %v862 = vmul.f32 %v860, 0.5
    %v863 = vmul.f32 %v861, 0.5
    %v864 = vtanh.pop %v862
    %v865 = vtanh.pop %v863
    %v866 = vadd.f32 %v864, 1.0
    %v867 = vadd.f32 %v865, 1.0
    %v868 = vmul.f32 %v866, 0.5
    %v869 = vmul.f32 %v867, 0.5
    %v870 = vmul.f32 %v858, %v868
    %v871 = vmul.f32 %v859, %v869
    %s872 = scalar_lea.vmem [#allocation2], 128
    %v873 = vld [vmem:[%s872] sm:$0xf]
    %v874 = vld [vmem:[%s872 + $0x4] sm:$0xf]
    %v875 = vld [vmem:[%s872 + $0x8] sm:$0xf]
    %v876 = vld [vmem:[%s872 + $0xc] sm:$0xf]
    %v877 = vld [vmem:[%s872 + $0x10] sm:$0xf]
    %v878 = vld [vmem:[%s872 + $0x14] sm:$0xf]
    %v879 = vld [vmem:[%s872 + $0x18] sm:$0xf]
    %v880 = vld [vmem:[%s872 + $0x1c] sm:$0xf]
    %v881 = vld [vmem:[%s872 + $0x20] sm:$0xf]
    %v882 = vld [vmem:[%s872 + $0x24] sm:$0xf]
    %v883 = vld [vmem:[%s872 + $0x28] sm:$0xf]
    %v884 = vld [vmem:[%s872 + $0x2c] sm:$0xf]
    %v885 = vld [vmem:[%s872 + $0x30] sm:$0xf]
    %v886 = vld [vmem:[%s872 + $0x34] sm:$0xf]
    %v887 = vld [vmem:[%s872 + $0x38] sm:$0xf]
    %v888 = vld [vmem:[%s872 + $0x3c] sm:$0xf]
    %v889 = vld [vmem:[%s6 + $0x6] sm:$0x1]
    %v890 = vld [vmem:[%s6 + $0x7] sm:$0x1]
    %v891 = vpack.c.bf16 %v871, %v870
    %v892 = vperm.slane %v889, 0
    %v909 = vunpack.c.l.b16 %v873
    %v910 = vunpack.c.l.b16 %v874
    %v911 = vunpack.c.l.b16 %v875
    %v912 = vunpack.c.l.b16 %v876
    %v913 = vunpack.c.l.b16 %v877
    %v914 = vunpack.c.l.b16 %v878
    %v915 = vunpack.c.l.b16 %v879
    %v916 = vunpack.c.l.b16 %v880
    %v917 = vunpack.c.l.b16 %v881
    %v918 = vunpack.c.l.b16 %v882
    %v919 = vunpack.c.l.b16 %v883
    %v920 = vunpack.c.l.b16 %v884
    %v921 = vunpack.c.l.b16 %v885
    %v922 = vunpack.c.l.b16 %v886
    %v923 = vunpack.c.l.b16 %v887
    %v924 = vunpack.c.l.b16 %v888
    %v925 = vpack.c.b16 %v910, %v909
    %v926 = vpack.c.b16 %v912, %v911
    %v927 = vpack.c.b16 %v914, %v913
    %v928 = vpack.c.b16 %v916, %v915
    %v929 = vpack.c.b16 %v918, %v917
    %v930 = vpack.c.b16 %v920, %v919
    %v931 = vpack.c.b16 %v922, %v921
    %v932 = vpack.c.b16 %v924, %v923
    %941 = vmatpush.bf16.msra.mxu0 %v932
    %942 = vmatpush.bf16.msra.mxu0 %v931
    %943 = vmatpush.bf16.msra.mxu0 %v930
    %944 = vmatpush.bf16.msra.mxu0 %v929
    %945 = vmatpush.bf16.msra.mxu0 %v928
    %946 = vmatpush.bf16.msra.mxu0 %v927
    %947 = vmatpush.bf16.msra.mxu0 %v926
    %948 = vmatpush.bf16.msra.mxu0 %v925
    %949 = vmatmul.bf16.gmra.mxu0 %v891
    %v950 = vpop.f32.mrf.mxu0
    %v951 = vadd.f32 %v892, %v950
    %v952 = vpop.f32.mrf.mxu0
    %v953 = vadd.f32 %v892, %v952
    %954 = vdwg.mxu0
    %v955 = vperm.slane %v890, 0
    %v956 = vmul.f32 %v70, %v955
    %v957 = vmul.f32 %v75, %v955
    %v958 = vadd.f32 %v951, %v956
    %v959 = vadd.f32 %v953, %v957
    %v960 = vmul.f32 %v958, %v503
    %v961 = vmul.f32 %v959, %v505
    %v962 = vmul.f32 %v960, 0.5
    %v963 = vmul.f32 %v961, 0.5
    %v964 = vtanh.pop %v962
    %v965 = vtanh.pop %v963
    %v966 = vadd.f32 %v964, 1.0
    %v967 = vadd.f32 %v965, 1.0
    %v968 = vmul.f32 %v966, 0.5
    %v969 = vmul.f32 %v967, 0.5
    %v970 = vmul.f32 %v958, %v968
    %v971 = vmul.f32 %v959, %v969
    %s972 = scalar_lea.vmem [#allocation2], 192
    %v973 = vld [vmem:[%s972] sm:$0xf]
    %v974 = vld [vmem:[%s972 + $0x4] sm:$0xf]
    %v975 = vld [vmem:[%s972 + $0x8] sm:$0xf]
    %v976 = vld [vmem:[%s972 + $0xc] sm:$0xf]
    %v977 = vld [vmem:[%s972 + $0x10] sm:$0xf]
    %v978 = vld [vmem:[%s972 + $0x14] sm:$0xf]
    %v979 = vld [vmem:[%s972 + $0x18] sm:$0xf]
    %v980 = vld [vmem:[%s972 + $0x1c] sm:$0xf]
    %v981 = vld [vmem:[%s972 + $0x20] sm:$0xf]
    %v982 = vld [vmem:[%s972 + $0x24] sm:$0xf]
    %v983 = vld [vmem:[%s972 + $0x28] sm:$0xf]
    %v984 = vld [vmem:[%s972 + $0x2c] sm:$0xf]
    %v985 = vld [vmem:[%s972 + $0x30] sm:$0xf]
    %v986 = vld [vmem:[%s972 + $0x34] sm:$0xf]
    %v987 = vld [vmem:[%s972 + $0x38] sm:$0xf]
    %v988 = vld [vmem:[%s972 + $0x3c] sm:$0xf]
    %v989 = vld [vmem:[%s6 + $0x8] sm:$0x1]
    %v990 = vld [vmem:[%s6 + $0x9] sm:$0x1]
    %v991 = vpack.c.bf16 %v971, %v970
    %v992 = vperm.slane %v989, 0
    %v1009 = vunpack.c.l.b16 %v973
    %v1010 = vunpack.c.l.b16 %v974
    %v1011 = vunpack.c.l.b16 %v975
    %v1012 = vunpack.c.l.b16 %v976
    %v1013 = vunpack.c.l.b16 %v977
    %v1014 = vunpack.c.l.b16 %v978
    %v1015 = vunpack.c.l.b16 %v979
    %v1016 = vunpack.c.l.b16 %v980
    %v1017 = vunpack.c.l.b16 %v981
    %v1018 = vunpack.c.l.b16 %v982
    %v1019 = vunpack.c.l.b16 %v983
    %v1020 = vunpack.c.l.b16 %v984
    %v1021 = vunpack.c.l.b16 %v985
    %v1022 = vunpack.c.l.b16 %v986
    %v1023 = vunpack.c.l.b16 %v987
    %v1024 = vunpack.c.l.b16 %v988
    %v1025 = vpack.c.b16 %v1010, %v1009
    %v1026 = vpack.c.b16 %v1012, %v1011
    %v1027 = vpack.c.b16 %v1014, %v1013
    %v1028 = vpack.c.b16 %v1016, %v1015
    %v1029 = vpack.c.b16 %v1018, %v1017
    %v1030 = vpack.c.b16 %v1020, %v1019
    %v1031 = vpack.c.b16 %v1022, %v1021
    %v1032 = vpack.c.b16 %v1024, %v1023
    %1041 = vmatpush.bf16.msra.mxu0 %v1032
    %1042 = vmatpush.bf16.msra.mxu0 %v1031
    %1043 = vmatpush.bf16.msra.mxu0 %v1030
    %1044 = vmatpush.bf16.msra.mxu0 %v1029
    %1045 = vmatpush.bf16.msra.mxu0 %v1028
    %1046 = vmatpush.bf16.msra.mxu0 %v1027
    %1047 = vmatpush.bf16.msra.mxu0 %v1026
    %1048 = vmatpush.bf16.msra.mxu0 %v1025
    %1049 = vmatmul.bf16.gmra.mxu0 %v991
    %v1050 = vpop.f32.mrf.mxu0
    %v1051 = vadd.f32 %v992, %v1050
    %v1052 = vpop.f32.mrf.mxu0
    %v1053 = vadd.f32 %v992, %v1052
    %1054 = vdwg.mxu0
    %v1055 = vperm.slane %v990, 0
    %v1056 = vmul.f32 %v70, %v1055
    %v1057 = vmul.f32 %v75, %v1055
    %v1058 = vadd.f32 %v1051, %v1056
    %v1059 = vadd.f32 %v1053, %v1057
    %v1060 = vmul.f32 %v1058, %v610
    %v1061 = vmul.f32 %v1059, %v611
    %v1062 = vmul.f32 %v1060, 0.5
    %v1063 = vmul.f32 %v1061, 0.5
    %v1064 = vtanh.pop %v1062
    %v1065 = vtanh.pop %v1063
    %v1066 = vadd.f32 %v1064, 1.0
    %v1067 = vadd.f32 %v1065, 1.0
    %v1068 = vmul.f32 %v1066, 0.5
    %v1069 = vmul.f32 %v1067, 0.5
    %v1070 = vmul.f32 %v1058, %v1068
    %v1071 = vmul.f32 %v1059, %v1069
    %v1072 = vld [vmem:[%s4] sm:$0xf]
    %v1073 = vld [vmem:[%s4 + $0x4] sm:$0xf]
    %v1074 = vld [vmem:[%s4 + $0x8] sm:$0xf]
    %v1075 = vld [vmem:[%s4 + $0xc] sm:$0xf]
    %v1076 = vld [vmem:[%s4 + $0x10] sm:$0xf]
    %v1077 = vld [vmem:[%s4 + $0x14] sm:$0xf]
    %v1078 = vld [vmem:[%s4 + $0x18] sm:$0xf]
    %v1079 = vld [vmem:[%s4 + $0x1c] sm:$0xf]
    %v1080 = vld [vmem:[%s4 + $0x20] sm:$0xf]
    %v1081 = vld [vmem:[%s4 + $0x24] sm:$0xf]
    %v1082 = vld [vmem:[%s4 + $0x28] sm:$0xf]
    %v1083 = vld [vmem:[%s4 + $0x2c] sm:$0xf]
    %v1084 = vld [vmem:[%s4 + $0x30] sm:$0xf]
    %v1085 = vld [vmem:[%s4 + $0x34] sm:$0xf]
    %v1086 = vld [vmem:[%s4 + $0x38] sm:$0xf]
    %v1087 = vld [vmem:[%s4 + $0x3c] sm:$0xf]
    %v1088 = vld [vmem:[%s6 + $0xa] sm:$0x1]
    %v1089 = vld [vmem:[%s6 + $0xb] sm:$0x1]
    %v1090 = vpack.c.bf16 %v1071, %v1070
    %v1091 = vperm.slane %v1088, 0
    %v1108 = vunpack.c.l.b16 %v1072
    %v1109 = vunpack.c.l.b16 %v1073
    %v1110 = vunpack.c.l.b16 %v1074
    %v1111 = vunpack.c.l.b16 %v1075
    %v1112 = vunpack.c.l.b16 %v1076
    %v1113 = vunpack.c.l.b16 %v1077
    %v1114 = vunpack.c.l.b16 %v1078
    %v1115 = vunpack.c.l.b16 %v1079
    %v1116 = vunpack.c.l.b16 %v1080
    %v1117 = vunpack.c.l.b16 %v1081
    %v1118 = vunpack.c.l.b16 %v1082
    %v1119 = vunpack.c.l.b16 %v1083
    %v1120 = vunpack.c.l.b16 %v1084
    %v1121 = vunpack.c.l.b16 %v1085
    %v1122 = vunpack.c.l.b16 %v1086
    %v1123 = vunpack.c.l.b16 %v1087
    %v1124 = vpack.c.b16 %v1109, %v1108
    %v1125 = vpack.c.b16 %v1111, %v1110
    %v1126 = vpack.c.b16 %v1113, %v1112
    %v1127 = vpack.c.b16 %v1115, %v1114
    %v1128 = vpack.c.b16 %v1117, %v1116
    %v1129 = vpack.c.b16 %v1119, %v1118
    %v1130 = vpack.c.b16 %v1121, %v1120
    %v1131 = vpack.c.b16 %v1123, %v1122
    %1140 = vmatpush.bf16.msra.mxu0 %v1131
    %1141 = vmatpush.bf16.msra.mxu0 %v1130
    %1142 = vmatpush.bf16.msra.mxu0 %v1129
    %1143 = vmatpush.bf16.msra.mxu0 %v1128
    %1144 = vmatpush.bf16.msra.mxu0 %v1127
    %1145 = vmatpush.bf16.msra.mxu0 %v1126
    %1146 = vmatpush.bf16.msra.mxu0 %v1125
    %1147 = vmatpush.bf16.msra.mxu0 %v1124
    %1148 = vmatmul.bf16.gmra.mxu0 %v1090
    %v1149 = vpop.f32.mrf.mxu0
    %v1150 = vadd.f32 %v1091, %v1149
    %v1151 = vpop.f32.mrf.mxu0
    %v1152 = vadd.f32 %v1091, %v1151
    %1153 = vdwg.mxu0
    %v1154 = vperm.slane %v1089, 0
    %v1155 = vmul.f32 %v70, %v1154
    %v1156 = vmul.f32 %v75, %v1154
    %v1157 = vadd.f32 %v1150, %v1155
    %v1158 = vadd.f32 %v1152, %v1156
    %vm1159 = vcmask 130048
    %1160 = vst.msk [vmem:[%s8] sm:$0xff] %vm1159, %v1157
    %1161 = vst.msk [vmem:[%s8 + $0x8] sm:$0xff] %vm1159, %v1158
    // Predicated region
    $region42: #{state_mlp_forward.1} parent=1 // pred_check
      _
    $region43: #{state_mlp_forward.1} parent=1 // pred_check_branch
      %1163 = sbr.rel (0) target = $region45
    $region44: #{state_mlp_forward.1} parent=1 // pred_region
      _
    $region45: #{state_mlp_forward.1} parent=1 // pred_fallthru
      _
    // Predicated region
    $region46: #{state_mlp_forward.1} parent=1 // pred_check
      _
    $region47: #{state_mlp_forward.1} parent=1 // pred_check_branch
      %1165 = sbr.rel (0) target = $region49
    $region48: #{state_mlp_forward.1} parent=1 // pred_region
      _
    $region49: #{state_mlp_forward.1} parent=1 // pred_fallthru
      _
    %1166 = vsyncpa [#allocation3], 1
    %1167 = vsyncpa [#allocation5], 1

</llo_original>
